<compile_context>
chip_gen: v7x
topology: tpu7x:2x2x1
jax: 0.10.0
libtpu: 0.0.40
codegen_flags: <defaults>
</compile_context>

<pallas_src>
import functools

import jax
import jax.numpy as jnp
from jax.experimental import pallas as pl
from jax.experimental.pallas import tpu as pltpu


def _round_up(x, m):
    return ((x + m - 1) // m) * m


def char_decoder_kernel(ids_ref,                                   # SMEM (scalar prefetch)
                        xg_ref, whh_ref, h0_ref, c0_ref, wout_ref, bout_ref,
                        scores_ref, hN_ref, cN_ref,
                        hhist_ref,
                        *, seq_len, batch_pad, batch_tile, gate_width,
                        bf16_vocab_proj):
    L, Bp, Bt, Hg = seq_len, batch_pad, batch_tile, gate_width
    col0 = pl.program_id(0) * Bt        # first padded-batch column of this tile

    def step(t, carry):
        h_prev, c_prev = carry
        # Gather this step's per-token input-gate rows (emb @ W_ih^T + bias)
        # from the VMEM-resident table, indexed by char ids held in SMEM.
        # TODO(synk): for large batch tiles (Bt >= 128) replace the per-row
        # loads with a one-hot MXU gather or a strided DMA gather.
        rows = [xg_ref[pl.ds(ids_ref[t * Bp + col0 + b], 1), :]
                for b in range(Bt)]
        x_gates = jnp.concatenate(rows, axis=0)                     # (Bt, 4*Hg)
        gates = x_gates + jnp.dot(h_prev, whh_ref[...],
                                  preferred_element_type=jnp.float32)
        # PyTorch LSTM gate order: input, forget, cell(g), output.
        i_g = jax.nn.sigmoid(gates[:, 0 * Hg:1 * Hg])
        f_g = jax.nn.sigmoid(gates[:, 1 * Hg:2 * Hg])
        g_g = jnp.tanh(gates[:, 2 * Hg:3 * Hg])
        o_g = jax.nn.sigmoid(gates[:, 3 * Hg:4 * Hg])
        c_t = f_g * c_prev + i_g * g_g
        h_t = o_g * jnp.tanh(c_t)
        row = pl.multiple_of(t * Bt, 8)
        hhist_ref[pl.ds(row, Bt), :] = h_t
        return (h_t, c_t)

    # Short sequences: full unroll; long sequences: partial unroll to bound the
    # instruction stream and vreg live ranges.
    unroll = True if L <= 16 else 8
    h_fin, c_fin = jax.lax.fori_loop(0, L, step,
                                     (h0_ref[...], c0_ref[...]),
                                     unroll=unroll)
    hN_ref[...] = h_fin
    cN_ref[...] = c_fin

    # Deferred vocab projection over all timesteps of this batch tile in one
    # MXU pass; scores stored lane-dense (Vp is a multiple of 128).
    hh = hhist_ref[...]
    wo = wout_ref[...]
    if bf16_vocab_proj:                    # v6e/v7x production option
        hh = hh.astype(jnp.bfloat16)
        wo = wo.astype(jnp.bfloat16)
    proj = (jnp.dot(hh, wo, preferred_element_type=jnp.float32)
            + bout_ref[...])
    scores_ref[...] = proj.reshape(L, Bt, -1)


def char_decoder_forward(input_ids, dec_hidden, params, *, bf16_vocab_proj=False):
    """Pallas implementation of CharDecoder.forward.

    input_ids : (L, B) int32
    dec_hidden: (h0, c0), each (1, B, H) float32
    returns   : scores (L, B, V), (h_n, c_n) each (1, B, H)
    """
    emb = params["emb"]          # (V, E)
    W_ih = params["W_ih"]        # (4H, E)
    W_hh = params["W_hh"]        # (4H, H)
    b_ih = params["b_ih"]        # (4H,)
    b_hh = params["b_hh"]        # (4H,)
    W_out = params["W_out"]      # (V, H)
    b_out = params["b_out"]      # (V,)

    L, B = input_ids.shape
    V, _E = emb.shape
    H = W_hh.shape[1]
    f32 = jnp.float32

    LANE, SUB = 128, 8
    # Per-gate stored width: multiple of 32 so the concatenated 4*Hg gate block
    # is lane aligned (4*32 = 128) without 4x zero padding when H < 128.
    Hg = _round_up(H, 32)
    Vp = _round_up(V, LANE)      # lane-dense scores width
    Vr = _round_up(V, SUB)       # table rows, sublane aligned

    # Batch tiling: one grid step per batch tile.
    Bt = min(_round_up(B, SUB), 128)
    Bp = _round_up(B, Bt)
    nb = Bp // Bt

    # --- Fold embedding + input-to-gate GEMM + both biases into one small table.
    bias = (b_ih + b_hh).astype(f32)
    tab = emb.astype(f32) @ W_ih.astype(f32).T + bias               # (V, 4H)
    whh_t = W_hh.astype(f32).T                                       # (H, 4H)
    xg_tab = jnp.zeros((Vr, 4 * Hg), f32)
    whh_p = jnp.zeros((Hg, 4 * Hg), f32)
    for g in range(4):
        xg_tab = xg_tab.at[:V, g * Hg:g * Hg + H].set(tab[:, g * H:(g + 1) * H])
        whh_p = whh_p.at[:H, g * Hg:g * Hg + H].set(whh_t[:, g * H:(g + 1) * H])
    # Invariant: padded gate columns of xg_tab / whh_p and padded h0/c0 state
    # columns are all zero, so padded hidden lanes stay exactly 0 through the
    # recurrence (sigmoid(0) * tanh(0) = 0) and never leak into real outputs.

    wout_p = jnp.zeros((Hg, Vp), f32).at[:H, :V].set(W_out.astype(f32).T)
    bout_p = jnp.zeros((1, Vp), f32).at[0, :V].set(b_out.astype(f32))

    h0, c0 = dec_hidden
    h0p = jnp.zeros((Bp, Hg), f32).at[:B, :H].set(h0[0].astype(f32))
    c0p = jnp.zeros((Bp, Hg), f32).at[:B, :H].set(c0[0].astype(f32))

    # Character ids -> SMEM via scalar prefetch: 1 int32 per token of HBM traffic.
    ids_pad = jnp.zeros((L, Bp), jnp.int32).at[:, :B].set(input_ids.astype(jnp.int32))
    ids_flat = ids_pad.reshape(L * Bp)

    kernel = functools.partial(
        char_decoder_kernel, seq_len=L, batch_pad=Bp, batch_tile=Bt,
        gate_width=Hg, bf16_vocab_proj=bf16_vocab_proj)

    grid_spec = pltpu.PrefetchScalarGridSpec(
        num_scalar_prefetch=1,
        grid=(nb,),
        in_specs=[
            pl.BlockSpec((Vr, 4 * Hg), lambda i, ids: (0, 0)),    # xg table
            pl.BlockSpec((Hg, 4 * Hg), lambda i, ids: (0, 0)),    # W_hh (gate layout)
            pl.BlockSpec((Bt, Hg), lambda i, ids: (i, 0)),        # h0 tile
            pl.BlockSpec((Bt, Hg), lambda i, ids: (i, 0)),        # c0 tile
            pl.BlockSpec((Hg, Vp), lambda i, ids: (0, 0)),        # W_out
            pl.BlockSpec((1, Vp), lambda i, ids: (0, 0)),         # b_out
        ],
        out_specs=(
            pl.BlockSpec((L, Bt, Vp), lambda i, ids: (0, i, 0)),  # scores
            pl.BlockSpec((Bt, Hg), lambda i, ids: (i, 0)),        # h_n
            pl.BlockSpec((Bt, Hg), lambda i, ids: (i, 0)),        # c_n
        ),
        scratch_shapes=[pltpu.VMEM((L * Bt, Hg), f32)],           # h_t history
    )

    # Scoped-VMEM budget sized to the resident buffers with headroom.
    resident_bytes = 4 * (Vr * 4 * Hg + Hg * 4 * Hg + Hg * Vp + Vp
                          + 4 * Bt * Hg + L * Bt * Vp + L * Bt * Hg)
    vmem_limit = min(max(2 * resident_bytes, 16 << 20), 100 << 20)

    scores_p, hN, cN = pl.pallas_call(
        kernel,
        grid_spec=grid_spec,
        out_shape=(
            jax.ShapeDtypeStruct((L, Bp, Vp), f32),
            jax.ShapeDtypeStruct((Bp, Hg), f32),
            jax.ShapeDtypeStruct((Bp, Hg), f32),
        ),
        compiler_params=pltpu.CompilerParams(
            dimension_semantics=("parallel",),
            vmem_limit_bytes=vmem_limit),
    )(ids_flat, xg_tab, whh_p, h0p, c0p, wout_p, bout_p)

    scores = scores_p[:, :B, :V]
    h_n = hN[None, :B, :H]
    c_n = cN[None, :B, :H]
    return scores, (h_n, c_n)


def reference_forward(input_ids, dec_hidden, params):
    """Pure-JAX reference mirroring PyTorch CharDecoder.forward."""
    emb, W_ih, W_hh = params["emb"], params["W_ih"], params["W_hh"]
    b_ih, b_hh = params["b_ih"], params["b_hh"]
    W_out, b_out = params["W_out"], params["b_out"]
    H = W_hh.shape[1]

    x_emb = jnp.take(emb, input_ids, axis=0)   # (L, B, E)
    h, c = dec_hidden[0][0], dec_hidden[1][0]  # (B, H)

    def step(carry, x_t):
        h, c = carry
        gates = x_t @ W_ih.T + b_ih + h @ W_hh.T + b_hh
        i_g = jax.nn.sigmoid(gates[:, 0 * H:1 * H])
        f_g = jax.nn.sigmoid(gates[:, 1 * H:2 * H])
        g_g = jnp.tanh(gates[:, 2 * H:3 * H])
        o_g = jax.nn.sigmoid(gates[:, 3 * H:4 * H])
        c_t = f_g * c + i_g * g_g
        h_t = o_g * jnp.tanh(c_t)
        return (h_t, c_t), h_t @ W_out.T + b_out

    (h, c), scores = jax.lax.scan(step, (h, c), x_emb)
    return scores, (h[None], c[None])


def init_params(key, vocab_size, char_embedding_size, hidden_size, pad_idx=0):
    ks = jax.random.split(key, 7)
    s = 0.1
    emb = s * jax.random.normal(ks[0], (vocab_size, char_embedding_size), jnp.float32)
    emb = emb.at[pad_idx].set(0.0)  # nn.Embedding padding_idx row is zero
    return {
        "emb": emb,
        "W_ih": s * jax.random.normal(ks[1], (4 * hidden_size, char_embedding_size), jnp.float32),
        "W_hh": s * jax.random.normal(ks[2], (4 * hidden_size, hidden_size), jnp.float32),
        "b_ih": s * jax.random.normal(ks[3], (4 * hidden_size,), jnp.float32),
        "b_hh": s * jax.random.normal(ks[4], (4 * hidden_size,), jnp.float32),
        "W_out": s * jax.random.normal(ks[5], (vocab_size, hidden_size), jnp.float32),
        "b_out": s * jax.random.normal(ks[6], (vocab_size,), jnp.float32),
    }


if __name__ == "__main__":
    # Small shapes consistent with the module: char vocab, char embeddings, LSTM hidden.
    L, B = 8, 4
    HIDDEN = 32
    CHAR_EMB = 50
    VOCAB = 30
    PAD = 0

    key = jax.random.PRNGKey(0)
    k_par, k_in, k_h, k_c = jax.random.split(key, 4)

    params = init_params(k_par, VOCAB, CHAR_EMB, HIDDEN, pad_idx=PAD)
    input_ids = jax.random.randint(k_in, (L, B), 0, VOCAB, dtype=jnp.int32)
    h0 = 0.1 * jax.random.normal(k_h, (1, B, HIDDEN), jnp.float32)
    c0 = 0.1 * jax.random.normal(k_c, (1, B, HIDDEN), jnp.float32)

    scores, (h_n, c_n) = char_decoder_forward(input_ids, (h0, c0), params)
    jax.block_until_ready((scores, h_n, c_n))

    # Sanity check vs. pure-JAX reference of the same math (f32 end to end).
    scores_ref, (h_ref, c_ref) = reference_forward(input_ids, (h0, c0), params)
    assert scores.shape == (L, B, VOCAB)
    assert h_n.shape == (1, B, HIDDEN) and c_n.shape == (1, B, HIDDEN)
    assert jnp.allclose(scores, scores_ref, atol=1e-4, rtol=1e-4)
    assert jnp.allclose(h_n, h_ref, atol=1e-4, rtol=1e-4)
    assert jnp.allclose(c_n, c_ref, atol=1e-4, rtol=1e-4)

    # TODO(synk): train_forward's masked cross-entropy sum and decode_greedy's
    # python-string assembly are host-side glue, not implemented in the kernel.
    print("KERNEL_OK")
</pallas_src>

<mosaic_0001>
module attributes {stable_mosaic.version = 11 : i64} {
  func.func @char_decoder_kernel(%arg0: i32, %arg1: memref<64xi32, #tpu.memory_space<smem>>, %arg2: memref<32x128xf32, #tpu.memory_space<vmem>>, %arg3: memref<32x128xf32, #tpu.memory_space<vmem>>, %arg4: memref<8x32xf32, #tpu.memory_space<vmem>>, %arg5: memref<8x32xf32, #tpu.memory_space<vmem>>, %arg6: memref<32x128xf32, #tpu.memory_space<vmem>>, %arg7: memref<1x128xf32, #tpu.memory_space<vmem>>, %arg8: memref<8x8x128xf32, #tpu.memory_space<vmem>>, %arg9: memref<8x32xf32, #tpu.memory_space<vmem>>, %arg10: memref<8x32xf32, #tpu.memory_space<vmem>>, %arg11: memref<64x32xf32, #tpu.memory_space<vmem>>) attributes {dimension_semantics = [#tpu.dimension_semantics<parallel>], iteration_bounds = array<i64: 1>, scalar_prefetch = 1 : i64, scratch_operands = 1 : i64, tpu.core_type = #tpu.core_type<tc>, window_params = [{pipeline_mode = #tpu.pipeline_mode<synchronous>, transform_indices = @transform_0, window_bounds = array<i64: 32, 128>}, {pipeline_mode = #tpu.pipeline_mode<synchronous>, transform_indices = @transform_1, window_bounds = array<i64: 32, 128>}, {transform_indices = @transform_2, window_bounds = array<i64: 8, 32>}, {transform_indices = @transform_3, window_bounds = array<i64: 8, 32>}, {pipeline_mode = #tpu.pipeline_mode<synchronous>, transform_indices = @transform_4, window_bounds = array<i64: 32, 128>}, {pipeline_mode = #tpu.pipeline_mode<synchronous>, transform_indices = @transform_5, window_bounds = array<i64: 1, 128>}, {transform_indices = @transform_6, window_bounds = array<i64: 8, 8, 128>}, {transform_indices = @transform_7, window_bounds = array<i64: 8, 32>}, {transform_indices = @transform_8, window_bounds = array<i64: 8, 32>}]} {
    %c8_i32 = arith.constant 8 : i32
    %0 = arith.muli %arg0, %c8_i32 : i32
    %c0 = arith.constant 0 : index
    %c0_0 = arith.constant 0 : index
    %1 = vector.load %arg4[%c0, %c0_0] : memref<8x32xf32, #tpu.memory_space<vmem>>, vector<8x32xf32>
    %c0_1 = arith.constant 0 : index
    %c0_2 = arith.constant 0 : index
    %2 = vector.load %arg5[%c0_1, %c0_2] : memref<8x32xf32, #tpu.memory_space<vmem>>, vector<8x32xf32>
    %c0_i32 = arith.constant 0 : i32
    %c8_i32_3 = arith.constant 8 : i32
    %3 = arith.muli %c0_i32, %c8_i32_3 : i32
    %4 = arith.addi %3, %0 : i32
    %c0_i32_4 = arith.constant 0 : i32
    %5 = arith.addi %4, %c0_i32_4 : i32
    %6 = arith.index_cast %5 : i32 to index
    %7 = memref.load %arg1[%6] : memref<64xi32, #tpu.memory_space<smem>>
    %8 = arith.index_cast %7 : i32 to index
    %c0_5 = arith.constant 0 : index
    %9 = vector.load %arg2[%8, %c0_5] : memref<32x128xf32, #tpu.memory_space<vmem>>, vector<1x128xf32>
    %c8_i32_6 = arith.constant 8 : i32
    %10 = arith.muli %c0_i32, %c8_i32_6 : i32
    %11 = arith.addi %10, %0 : i32
    %c1_i32 = arith.constant 1 : i32
    %12 = arith.addi %11, %c1_i32 : i32
    %13 = arith.index_cast %12 : i32 to index
    %14 = memref.load %arg1[%13] : memref<64xi32, #tpu.memory_space<smem>>
    %15 = arith.index_cast %14 : i32 to index
    %c0_7 = arith.constant 0 : index
    %16 = vector.load %arg2[%15, %c0_7] : memref<32x128xf32, #tpu.memory_space<vmem>>, vector<1x128xf32>
    %c8_i32_8 = arith.constant 8 : i32
    %17 = arith.muli %c0_i32, %c8_i32_8 : i32
    %18 = arith.addi %17, %0 : i32
    %c2_i32 = arith.constant 2 : i32
    %19 = arith.addi %18, %c2_i32 : i32
    %20 = arith.index_cast %19 : i32 to index
    %21 = memref.load %arg1[%20] : memref<64xi32, #tpu.memory_space<smem>>
    %22 = arith.index_cast %21 : i32 to index
    %c0_9 = arith.constant 0 : index
    %23 = vector.load %arg2[%22, %c0_9] : memref<32x128xf32, #tpu.memory_space<vmem>>, vector<1x128xf32>
    %c8_i32_10 = arith.constant 8 : i32
    %24 = arith.muli %c0_i32, %c8_i32_10 : i32
    %25 = arith.addi %24, %0 : i32
    %c3_i32 = arith.constant 3 : i32
    %26 = arith.addi %25, %c3_i32 : i32
    %27 = arith.index_cast %26 : i32 to index
    %28 = memref.load %arg1[%27] : memref<64xi32, #tpu.memory_space<smem>>
    %29 = arith.index_cast %28 : i32 to index
    %c0_11 = arith.constant 0 : index
    %30 = vector.load %arg2[%29, %c0_11] : memref<32x128xf32, #tpu.memory_space<vmem>>, vector<1x128xf32>
    %c8_i32_12 = arith.constant 8 : i32
    %31 = arith.muli %c0_i32, %c8_i32_12 : i32
    %32 = arith.addi %31, %0 : i32
    %c4_i32 = arith.constant 4 : i32
    %33 = arith.addi %32, %c4_i32 : i32
    %34 = arith.index_cast %33 : i32 to index
    %35 = memref.load %arg1[%34] : memref<64xi32, #tpu.memory_space<smem>>
    %36 = arith.index_cast %35 : i32 to index
    %c0_13 = arith.constant 0 : index
    %37 = vector.load %arg2[%36, %c0_13] : memref<32x128xf32, #tpu.memory_space<vmem>>, vector<1x128xf32>
    %c8_i32_14 = arith.constant 8 : i32
    %38 = arith.muli %c0_i32, %c8_i32_14 : i32
    %39 = arith.addi %38, %0 : i32
    %c5_i32 = arith.constant 5 : i32
    %40 = arith.addi %39, %c5_i32 : i32
    %41 = arith.index_cast %40 : i32 to index
    %42 = memref.load %arg1[%41] : memref<64xi32, #tpu.memory_space<smem>>
    %43 = arith.index_cast %42 : i32 to index
    %c0_15 = arith.constant 0 : index
    %44 = vector.load %arg2[%43, %c0_15] : memref<32x128xf32, #tpu.memory_space<vmem>>, vector<1x128xf32>
    %c8_i32_16 = arith.constant 8 : i32
    %45 = arith.muli %c0_i32, %c8_i32_16 : i32
    %46 = arith.addi %45, %0 : i32
    %c6_i32 = arith.constant 6 : i32
    %47 = arith.addi %46, %c6_i32 : i32
    %48 = arith.index_cast %47 : i32 to index
    %49 = memref.load %arg1[%48] : memref<64xi32, #tpu.memory_space<smem>>
    %50 = arith.index_cast %49 : i32 to index
    %c0_17 = arith.constant 0 : index
    %51 = vector.load %arg2[%50, %c0_17] : memref<32x128xf32, #tpu.memory_space<vmem>>, vector<1x128xf32>
    %c8_i32_18 = arith.constant 8 : i32
    %52 = arith.muli %c0_i32, %c8_i32_18 : i32
    %53 = arith.addi %52, %0 : i32
    %c7_i32 = arith.constant 7 : i32
    %54 = arith.addi %53, %c7_i32 : i32
    %55 = arith.index_cast %54 : i32 to index
    %56 = memref.load %arg1[%55] : memref<64xi32, #tpu.memory_space<smem>>
    %57 = arith.index_cast %56 : i32 to index
    %c0_19 = arith.constant 0 : index
    %58 = vector.load %arg2[%57, %c0_19] : memref<32x128xf32, #tpu.memory_space<vmem>>, vector<1x128xf32>
    %59 = tpu.concatenate %9, %16, %23, %30, %37, %44, %51, %58 in 0 : vector<1x128xf32>, vector<1x128xf32>, vector<1x128xf32>, vector<1x128xf32>, vector<1x128xf32>, vector<1x128xf32>, vector<1x128xf32>, vector<1x128xf32> -> vector<8x128xf32>
    %c0_20 = arith.constant 0 : index
    %c0_21 = arith.constant 0 : index
    %60 = vector.load %arg3[%c0_20, %c0_21] : memref<32x128xf32, #tpu.memory_space<vmem>>, vector<32x128xf32>
    %cst = arith.constant dense<0.000000e+00> : vector<8x128xf32>
    %61 = tpu.matmul %1, %60, %cst {dimension_numbers = #tpu.dot_dimension_numbers<[1], [0], [0], [1], [0, 0, 1, 1], [], []>} : vector<8x32xf32>, vector<32x128xf32>, vector<8x128xf32> -> vector<8x128xf32>
    %62 = arith.addf %59, %61 : vector<8x128xf32>
    %63 = vector.extract_strided_slice %62 {offsets = [0, 0], sizes = [8, 32], strides = [1, 1]} : vector<8x128xf32> to vector<8x32xf32>
    %64 = arith.negf %63 : vector<8x32xf32>
    %65 = math.exp %64 : vector<8x32xf32>
    %cst_22 = arith.constant 1.000000e+00 : f32
    %66 = vector.broadcast %cst_22 : f32 to vector<8x32xf32>
    %67 = arith.addf %66, %65 : vector<8x32xf32>
    %68 = arith.divf %66, %67 : vector<8x32xf32>
    %69 = vector.extract_strided_slice %62 {offsets = [0, 32], sizes = [8, 32], strides = [1, 1]} : vector<8x128xf32> to vector<8x32xf32>
    %70 = arith.negf %69 : vector<8x32xf32>
    %71 = math.exp %70 : vector<8x32xf32>
    %cst_23 = arith.constant 1.000000e+00 : f32
    %72 = vector.broadcast %cst_23 : f32 to vector<8x32xf32>
    %73 = arith.addf %72, %71 : vector<8x32xf32>
    %74 = arith.divf %72, %73 : vector<8x32xf32>
    %75 = vector.extract_strided_slice %62 {offsets = [0, 64], sizes = [8, 32], strides = [1, 1]} : vector<8x128xf32> to vector<8x32xf32>
    %76 = math.tanh %75 : vector<8x32xf32>
    %77 = vector.extract_strided_slice %62 {offsets = [0, 96], sizes = [8, 32], strides = [1, 1]} : vector<8x128xf32> to vector<8x32xf32>
    %78 = arith.negf %77 : vector<8x32xf32>
    %79 = math.exp %78 : vector<8x32xf32>
    %cst_24 = arith.constant 1.000000e+00 : f32
    %80 = vector.broadcast %cst_24 : f32 to vector<8x32xf32>
    %81 = arith.addf %80, %79 : vector<8x32xf32>
    %82 = arith.divf %80, %81 : vector<8x32xf32>
    %83 = arith.mulf %74, %2 : vector<8x32xf32>
    %84 = arith.mulf %68, %76 : vector<8x32xf32>
    %85 = arith.addf %83, %84 : vector<8x32xf32>
    %86 = math.tanh %85 : vector<8x32xf32>
    %87 = arith.mulf %82, %86 : vector<8x32xf32>
    %c8_i32_25 = arith.constant 8 : i32
    %88 = arith.muli %c0_i32, %c8_i32_25 : i32
    %89 = tpu.assume_multiple %88, 8 : i32
    %90 = arith.index_cast %89 : i32 to index
    %c0_26 = arith.constant 0 : index
    %91 = vector.load %arg11[%90, %c0_26] : memref<64x32xf32, #tpu.memory_space<vmem>>, vector<8x32xf32>
    tpu.vector_store %arg11[%90, %c0_26], %87 {strides = array<i32>} : memref<64x32xf32, #tpu.memory_space<vmem>>, vector<8x32xf32>,
    %c1_i32_27 = arith.constant 1 : i32
    %c8_i32_28 = arith.constant 8 : i32
    %92 = arith.muli %c1_i32_27, %c8_i32_28 : i32
    %93 = arith.addi %92, %0 : i32
    %c0_i32_29 = arith.constant 0 : i32
    %94 = arith.addi %93, %c0_i32_29 : i32
    %95 = arith.index_cast %94 : i32 to index
    %96 = memref.load %arg1[%95] : memref<64xi32, #tpu.memory_space<smem>>
    %97 = arith.index_cast %96 : i32 to index
    %c0_30 = arith.constant 0 : index
    %98 = vector.load %arg2[%97, %c0_30] : memref<32x128xf32, #tpu.memory_space<vmem>>, vector<1x128xf32>
    %c8_i32_31 = arith.constant 8 : i32
    %99 = arith.muli %c1_i32_27, %c8_i32_31 : i32
    %100 = arith.addi %99, %0 : i32
    %c1_i32_32 = arith.constant 1 : i32
    %101 = arith.addi %100, %c1_i32_32 : i32
    %102 = arith.index_cast %101 : i32 to index
    %103 = memref.load %arg1[%102] : memref<64xi32, #tpu.memory_space<smem>>
    %104 = arith.index_cast %103 : i32 to index
    %c0_33 = arith.constant 0 : index
    %105 = vector.load %arg2[%104, %c0_33] : memref<32x128xf32, #tpu.memory_space<vmem>>, vector<1x128xf32>
    %c8_i32_34 = arith.constant 8 : i32
    %106 = arith.muli %c1_i32_27, %c8_i32_34 : i32
    %107 = arith.addi %106, %0 : i32
    %c2_i32_35 = arith.constant 2 : i32
    %108 = arith.addi %107, %c2_i32_35 : i32
    %109 = arith.index_cast %108 : i32 to index
    %110 = memref.load %arg1[%109] : memref<64xi32, #tpu.memory_space<smem>>
    %111 = arith.index_cast %110 : i32 to index
    %c0_36 = arith.constant 0 : index
    %112 = vector.load %arg2[%111, %c0_36] : memref<32x128xf32, #tpu.memory_space<vmem>>, vector<1x128xf32>
    %c8_i32_37 = arith.constant 8 : i32
    %113 = arith.muli %c1_i32_27, %c8_i32_37 : i32
    %114 = arith.addi %113, %0 : i32
    %c3_i32_38 = arith.constant 3 : i32
    %115 = arith.addi %114, %c3_i32_38 : i32
    %116 = arith.index_cast %115 : i32 to index
    %117 = memref.load %arg1[%116] : memref<64xi32, #tpu.memory_space<smem>>
    %118 = arith.index_cast %117 : i32 to index
    %c0_39 = arith.constant 0 : index
    %119 = vector.load %arg2[%118, %c0_39] : memref<32x128xf32, #tpu.memory_space<vmem>>, vector<1x128xf32>
    %c8_i32_40 = arith.constant 8 : i32
    %120 = arith.muli %c1_i32_27, %c8_i32_40 : i32
    %121 = arith.addi %120, %0 : i32
    %c4_i32_41 = arith.constant 4 : i32
    %122 = arith.addi %121, %c4_i32_41 : i32
    %123 = arith.index_cast %122 : i32 to index
    %124 = memref.load %arg1[%123] : memref<64xi32, #tpu.memory_space<smem>>
    %125 = arith.index_cast %124 : i32 to index
    %c0_42 = arith.constant 0 : index
    %126 = vector.load %arg2[%125, %c0_42] : memref<32x128xf32, #tpu.memory_space<vmem>>, vector<1x128xf32>
    %c8_i32_43 = arith.constant 8 : i32
    %127 = arith.muli %c1_i32_27, %c8_i32_43 : i32
    %128 = arith.addi %127, %0 : i32
    %c5_i32_44 = arith.constant 5 : i32
    %129 = arith.addi %128, %c5_i32_44 : i32
    %130 = arith.index_cast %129 : i32 to index
    %131 = memref.load %arg1[%130] : memref<64xi32, #tpu.memory_space<smem>>
    %132 = arith.index_cast %131 : i32 to index
    %c0_45 = arith.constant 0 : index
    %133 = vector.load %arg2[%132, %c0_45] : memref<32x128xf32, #tpu.memory_space<vmem>>, vector<1x128xf32>
    %c8_i32_46 = arith.constant 8 : i32
    %134 = arith.muli %c1_i32_27, %c8_i32_46 : i32
    %135 = arith.addi %134, %0 : i32
    %c6_i32_47 = arith.constant 6 : i32
    %136 = arith.addi %135, %c6_i32_47 : i32
    %137 = arith.index_cast %136 : i32 to index
    %138 = memref.load %arg1[%137] : memref<64xi32, #tpu.memory_space<smem>>
    %139 = arith.index_cast %138 : i32 to index
    %c0_48 = arith.constant 0 : index
    %140 = vector.load %arg2[%139, %c0_48] : memref<32x128xf32, #tpu.memory_space<vmem>>, vector<1x128xf32>
    %c8_i32_49 = arith.constant 8 : i32
    %141 = arith.muli %c1_i32_27, %c8_i32_49 : i32
    %142 = arith.addi %141, %0 : i32
    %c7_i32_50 = arith.constant 7 : i32
    %143 = arith.addi %142, %c7_i32_50 : i32
    %144 = arith.index_cast %143 : i32 to index
    %145 = memref.load %arg1[%144] : memref<64xi32, #tpu.memory_space<smem>>
    %146 = arith.index_cast %145 : i32 to index
    %c0_51 = arith.constant 0 : index
    %147 = vector.load %arg2[%146, %c0_51] : memref<32x128xf32, #tpu.memory_space<vmem>>, vector<1x128xf32>
    %148 = tpu.concatenate %98, %105, %112, %119, %126, %133, %140, %147 in 0 : vector<1x128xf32>, vector<1x128xf32>, vector<1x128xf32>, vector<1x128xf32>, vector<1x128xf32>, vector<1x128xf32>, vector<1x128xf32>, vector<1x128xf32> -> vector<8x128xf32>
    %c0_52 = arith.constant 0 : index
    %c0_53 = arith.constant 0 : index
    %149 = vector.load %arg3[%c0_52, %c0_53] : memref<32x128xf32, #tpu.memory_space<vmem>>, vector<32x128xf32>
    %cst_54 = arith.constant dense<0.000000e+00> : vector<8x128xf32>
    %150 = tpu.matmul %87, %149, %cst_54 {dimension_numbers = #tpu.dot_dimension_numbers<[1], [0], [0], [1], [0, 0, 1, 1], [], []>} : vector<8x32xf32>, vector<32x128xf32>, vector<8x128xf32> -> vector<8x128xf32>
    %151 = arith.addf %148, %150 : vector<8x128xf32>
    %152 = vector.extract_strided_slice %151 {offsets = [0, 0], sizes = [8, 32], strides = [1, 1]} : vector<8x128xf32> to vector<8x32xf32>
    %153 = arith.negf %152 : vector<8x32xf32>
    %154 = math.exp %153 : vector<8x32xf32>
    %cst_55 = arith.constant 1.000000e+00 : f32
    %155 = vector.broadcast %cst_55 : f32 to vector<8x32xf32>
    %156 = arith.addf %155, %154 : vector<8x32xf32>
    %157 = arith.divf %155, %156 : vector<8x32xf32>
    %158 = vector.extract_strided_slice %151 {offsets = [0, 32], sizes = [8, 32], strides = [1, 1]} : vector<8x128xf32> to vector<8x32xf32>
    %159 = arith.negf %158 : vector<8x32xf32>
    %160 = math.exp %159 : vector<8x32xf32>
    %cst_56 = arith.constant 1.000000e+00 : f32
    %161 = vector.broadcast %cst_56 : f32 to vector<8x32xf32>
    %162 = arith.addf %161, %160 : vector<8x32xf32>
    %163 = arith.divf %161, %162 : vector<8x32xf32>
    %164 = vector.extract_strided_slice %151 {offsets = [0, 64], sizes = [8, 32], strides = [1, 1]} : vector<8x128xf32> to vector<8x32xf32>
    %165 = math.tanh %164 : vector<8x32xf32>
    %166 = vector.extract_strided_slice %151 {offsets = [0, 96], sizes = [8, 32], strides = [1, 1]} : vector<8x128xf32> to vector<8x32xf32>
    %167 = arith.negf %166 : vector<8x32xf32>
    %168 = math.exp %167 : vector<8x32xf32>
    %cst_57 = arith.constant 1.000000e+00 : f32
    %169 = vector.broadcast %cst_57 : f32 to vector<8x32xf32>
    %170 = arith.addf %169, %168 : vector<8x32xf32>
    %171 = arith.divf %169, %170 : vector<8x32xf32>
    %172 = arith.mulf %163, %85 : vector<8x32xf32>
    %173 = arith.mulf %157, %165 : vector<8x32xf32>
    %174 = arith.addf %172, %173 : vector<8x32xf32>
    %175 = math.tanh %174 : vector<8x32xf32>
    %176 = arith.mulf %171, %175 : vector<8x32xf32>
    %c8_i32_58 = arith.constant 8 : i32
    %177 = arith.muli %c1_i32_27, %c8_i32_58 : i32
    %178 = tpu.assume_multiple %177, 8 : i32
    %179 = arith.index_cast %178 : i32 to index
    %c0_59 = arith.constant 0 : index
    %180 = vector.load %arg11[%179, %c0_59] : memref<64x32xf32, #tpu.memory_space<vmem>>, vector<8x32xf32>
    tpu.vector_store %arg11[%179, %c0_59], %176 {strides = array<i32>} : memref<64x32xf32, #tpu.memory_space<vmem>>, vector<8x32xf32>,
    %c2_i32_60 = arith.constant 2 : i32
    %c8_i32_61 = arith.constant 8 : i32
    %181 = arith.muli %c2_i32_60, %c8_i32_61 : i32
    %182 = arith.addi %181, %0 : i32
    %c0_i32_62 = arith.constant 0 : i32
    %183 = arith.addi %182, %c0_i32_62 : i32
    %184 = arith.index_cast %183 : i32 to index
    %185 = memref.load %arg1[%184] : memref<64xi32, #tpu.memory_space<smem>>
    %186 = arith.index_cast %185 : i32 to index
    %c0_63 = arith.constant 0 : index
    %187 = vector.load %arg2[%186, %c0_63] : memref<32x128xf32, #tpu.memory_space<vmem>>, vector<1x128xf32>
    %c8_i32_64 = arith.constant 8 : i32
    %188 = arith.muli %c2_i32_60, %c8_i32_64 : i32
    %189 = arith.addi %188, %0 : i32
    %c1_i32_65 = arith.constant 1 : i32
    %190 = arith.addi %189, %c1_i32_65 : i32
    %191 = arith.index_cast %190 : i32 to index
    %192 = memref.load %arg1[%191] : memref<64xi32, #tpu.memory_space<smem>>
    %193 = arith.index_cast %192 : i32 to index
    %c0_66 = arith.constant 0 : index
    %194 = vector.load %arg2[%193, %c0_66] : memref<32x128xf32, #tpu.memory_space<vmem>>, vector<1x128xf32>
    %c8_i32_67 = arith.constant 8 : i32
    %195 = arith.muli %c2_i32_60, %c8_i32_67 : i32
    %196 = arith.addi %195, %0 : i32
    %c2_i32_68 = arith.constant 2 : i32
    %197 = arith.addi %196, %c2_i32_68 : i32
    %198 = arith.index_cast %197 : i32 to index
    %199 = memref.load %arg1[%198] : memref<64xi32, #tpu.memory_space<smem>>
    %200 = arith.index_cast %199 : i32 to index
    %c0_69 = arith.constant 0 : index
    %201 = vector.load %arg2[%200, %c0_69] : memref<32x128xf32, #tpu.memory_space<vmem>>, vector<1x128xf32>
    %c8_i32_70 = arith.constant 8 : i32
    %202 = arith.muli %c2_i32_60, %c8_i32_70 : i32
    %203 = arith.addi %202, %0 : i32
    %c3_i32_71 = arith.constant 3 : i32
    %204 = arith.addi %203, %c3_i32_71 : i32
    %205 = arith.index_cast %204 : i32 to index
    %206 = memref.load %arg1[%205] : memref<64xi32, #tpu.memory_space<smem>>
    %207 = arith.index_cast %206 : i32 to index
    %c0_72 = arith.constant 0 : index
    %208 = vector.load %arg2[%207, %c0_72] : memref<32x128xf32, #tpu.memory_space<vmem>>, vector<1x128xf32>
    %c8_i32_73 = arith.constant 8 : i32
    %209 = arith.muli %c2_i32_60, %c8_i32_73 : i32
    %210 = arith.addi %209, %0 : i32
    %c4_i32_74 = arith.constant 4 : i32
    %211 = arith.addi %210, %c4_i32_74 : i32
    %212 = arith.index_cast %211 : i32 to index
    %213 = memref.load %arg1[%212] : memref<64xi32, #tpu.memory_space<smem>>
    %214 = arith.index_cast %213 : i32 to index
    %c0_75 = arith.constant 0 : index
    %215 = vector.load %arg2[%214, %c0_75] : memref<32x128xf32, #tpu.memory_space<vmem>>, vector<1x128xf32>
    %c8_i32_76 = arith.constant 8 : i32
    %216 = arith.muli %c2_i32_60, %c8_i32_76 : i32
    %217 = arith.addi %216, %0 : i32
    %c5_i32_77 = arith.constant 5 : i32
    %218 = arith.addi %217, %c5_i32_77 : i32
    %219 = arith.index_cast %218 : i32 to index
    %220 = memref.load %arg1[%219] : memref<64xi32, #tpu.memory_space<smem>>
    %221 = arith.index_cast %220 : i32 to index
    %c0_78 = arith.constant 0 : index
    %222 = vector.load %arg2[%221, %c0_78] : memref<32x128xf32, #tpu.memory_space<vmem>>, vector<1x128xf32>
    %c8_i32_79 = arith.constant 8 : i32
    %223 = arith.muli %c2_i32_60, %c8_i32_79 : i32
    %224 = arith.addi %223, %0 : i32
    %c6_i32_80 = arith.constant 6 : i32
    %225 = arith.addi %224, %c6_i32_80 : i32
    %226 = arith.index_cast %225 : i32 to index
    %227 = memref.load %arg1[%226] : memref<64xi32, #tpu.memory_space<smem>>
    %228 = arith.index_cast %227 : i32 to index
    %c0_81 = arith.constant 0 : index
    %229 = vector.load %arg2[%228, %c0_81] : memref<32x128xf32, #tpu.memory_space<vmem>>, vector<1x128xf32>
    %c8_i32_82 = arith.constant 8 : i32
    %230 = arith.muli %c2_i32_60, %c8_i32_82 : i32
    %231 = arith.addi %230, %0 : i32
    %c7_i32_83 = arith.constant 7 : i32
    %232 = arith.addi %231, %c7_i32_83 : i32
    %233 = arith.index_cast %232 : i32 to index
    %234 = memref.load %arg1[%233] : memref<64xi32, #tpu.memory_space<smem>>
    %235 = arith.index_cast %234 : i32 to index
    %c0_84 = arith.constant 0 : index
    %236 = vector.load %arg2[%235, %c0_84] : memref<32x128xf32, #tpu.memory_space<vmem>>, vector<1x128xf32>
    %237 = tpu.concatenate %187, %194, %201, %208, %215, %222, %229, %236 in 0 : vector<1x128xf32>, vector<1x128xf32>, vector<1x128xf32>, vector<1x128xf32>, vector<1x128xf32>, vector<1x128xf32>, vector<1x128xf32>, vector<1x128xf32> -> vector<8x128xf32>
    %c0_85 = arith.constant 0 : index
    %c0_86 = arith.constant 0 : index
    %238 = vector.load %arg3[%c0_85, %c0_86] : memref<32x128xf32, #tpu.memory_space<vmem>>, vector<32x128xf32>
    %cst_87 = arith.constant dense<0.000000e+00> : vector<8x128xf32>
    %239 = tpu.matmul %176, %238, %cst_87 {dimension_numbers = #tpu.dot_dimension_numbers<[1], [0], [0], [1], [0, 0, 1, 1], [], []>} : vector<8x32xf32>, vector<32x128xf32>, vector<8x128xf32> -> vector<8x128xf32>
    %240 = arith.addf %237, %239 : vector<8x128xf32>
    %241 = vector.extract_strided_slice %240 {offsets = [0, 0], sizes = [8, 32], strides = [1, 1]} : vector<8x128xf32> to vector<8x32xf32>
    %242 = arith.negf %241 : vector<8x32xf32>
    %243 = math.exp %242 : vector<8x32xf32>
    %cst_88 = arith.constant 1.000000e+00 : f32
    %244 = vector.broadcast %cst_88 : f32 to vector<8x32xf32>
    %245 = arith.addf %244, %243 : vector<8x32xf32>
    %246 = arith.divf %244, %245 : vector<8x32xf32>
    %247 = vector.extract_strided_slice %240 {offsets = [0, 32], sizes = [8, 32], strides = [1, 1]} : vector<8x128xf32> to vector<8x32xf32>
    %248 = arith.negf %247 : vector<8x32xf32>
    %249 = math.exp %248 : vector<8x32xf32>
    %cst_89 = arith.constant 1.000000e+00 : f32
    %250 = vector.broadcast %cst_89 : f32 to vector<8x32xf32>
    %251 = arith.addf %250, %249 : vector<8x32xf32>
    %252 = arith.divf %250, %251 : vector<8x32xf32>
    %253 = vector.extract_strided_slice %240 {offsets = [0, 64], sizes = [8, 32], strides = [1, 1]} : vector<8x128xf32> to vector<8x32xf32>
    %254 = math.tanh %253 : vector<8x32xf32>
    %255 = vector.extract_strided_slice %240 {offsets = [0, 96], sizes = [8, 32], strides = [1, 1]} : vector<8x128xf32> to vector<8x32xf32>
    %256 = arith.negf %255 : vector<8x32xf32>
    %257 = math.exp %256 : vector<8x32xf32>
    %cst_90 = arith.constant 1.000000e+00 : f32
    %258 = vector.broadcast %cst_90 : f32 to vector<8x32xf32>
    %259 = arith.addf %258, %257 : vector<8x32xf32>
    %260 = arith.divf %258, %259 : vector<8x32xf32>
    %261 = arith.mulf %252, %174 : vector<8x32xf32>
    %262 = arith.mulf %246, %254 : vector<8x32xf32>
    %263 = arith.addf %261, %262 : vector<8x32xf32>
    %264 = math.tanh %263 : vector<8x32xf32>
    %265 = arith.mulf %260, %264 : vector<8x32xf32>
    %c8_i32_91 = arith.constant 8 : i32
    %266 = arith.muli %c2_i32_60, %c8_i32_91 : i32
    %267 = tpu.assume_multiple %266, 8 : i32
    %268 = arith.index_cast %267 : i32 to index
    %c0_92 = arith.constant 0 : index
    %269 = vector.load %arg11[%268, %c0_92] : memref<64x32xf32, #tpu.memory_space<vmem>>, vector<8x32xf32>
    tpu.vector_store %arg11[%268, %c0_92], %265 {strides = array<i32>} : memref<64x32xf32, #tpu.memory_space<vmem>>, vector<8x32xf32>,
    %c3_i32_93 = arith.constant 3 : i32
    %c8_i32_94 = arith.constant 8 : i32
    %270 = arith.muli %c3_i32_93, %c8_i32_94 : i32
    %271 = arith.addi %270, %0 : i32
    %c0_i32_95 = arith.constant 0 : i32
    %272 = arith.addi %271, %c0_i32_95 : i32
    %273 = arith.index_cast %272 : i32 to index
    %274 = memref.load %arg1[%273] : memref<64xi32, #tpu.memory_space<smem>>
    %275 = arith.index_cast %274 : i32 to index
    %c0_96 = arith.constant 0 : index
    %276 = vector.load %arg2[%275, %c0_96] : memref<32x128xf32, #tpu.memory_space<vmem>>, vector<1x128xf32>
    %c8_i32_97 = arith.constant 8 : i32
    %277 = arith.muli %c3_i32_93, %c8_i32_97 : i32
    %278 = arith.addi %277, %0 : i32
    %c1_i32_98 = arith.constant 1 : i32
    %279 = arith.addi %278, %c1_i32_98 : i32
    %280 = arith.index_cast %279 : i32 to index
    %281 = memref.load %arg1[%280] : memref<64xi32, #tpu.memory_space<smem>>
    %282 = arith.index_cast %281 : i32 to index
    %c0_99 = arith.constant 0 : index
    %283 = vector.load %arg2[%282, %c0_99] : memref<32x128xf32, #tpu.memory_space<vmem>>, vector<1x128xf32>
    %c8_i32_100 = arith.constant 8 : i32
    %284 = arith.muli %c3_i32_93, %c8_i32_100 : i32
    %285 = arith.addi %284, %0 : i32
    %c2_i32_101 = arith.constant 2 : i32
    %286 = arith.addi %285, %c2_i32_101 : i32
    %287 = arith.index_cast %286 : i32 to index
    %288 = memref.load %arg1[%287] : memref<64xi32, #tpu.memory_space<smem>>
    %289 = arith.index_cast %288 : i32 to index
    %c0_102 = arith.constant 0 : index
    %290 = vector.load %arg2[%289, %c0_102] : memref<32x128xf32, #tpu.memory_space<vmem>>, vector<1x128xf32>
    %c8_i32_103 = arith.constant 8 : i32
    %291 = arith.muli %c3_i32_93, %c8_i32_103 : i32
    %292 = arith.addi %291, %0 : i32
    %c3_i32_104 = arith.constant 3 : i32
    %293 = arith.addi %292, %c3_i32_104 : i32
    %294 = arith.index_cast %293 : i32 to index
    %295 = memref.load %arg1[%294] : memref<64xi32, #tpu.memory_space<smem>>
    %296 = arith.index_cast %295 : i32 to index
    %c0_105 = arith.constant 0 : index
    %297 = vector.load %arg2[%296, %c0_105] : memref<32x128xf32, #tpu.memory_space<vmem>>, vector<1x128xf32>
    %c8_i32_106 = arith.constant 8 : i32
    %298 = arith.muli %c3_i32_93, %c8_i32_106 : i32
    %299 = arith.addi %298, %0 : i32
    %c4_i32_107 = arith.constant 4 : i32
    %300 = arith.addi %299, %c4_i32_107 : i32
    %301 = arith.index_cast %300 : i32 to index
    %302 = memref.load %arg1[%301] : memref<64xi32, #tpu.memory_space<smem>>
    %303 = arith.index_cast %302 : i32 to index
    %c0_108 = arith.constant 0 : index
    %304 = vector.load %arg2[%303, %c0_108] : memref<32x128xf32, #tpu.memory_space<vmem>>, vector<1x128xf32>
    %c8_i32_109 = arith.constant 8 : i32
    %305 = arith.muli %c3_i32_93, %c8_i32_109 : i32
    %306 = arith.addi %305, %0 : i32
    %c5_i32_110 = arith.constant 5 : i32
    %307 = arith.addi %306, %c5_i32_110 : i32
    %308 = arith.index_cast %307 : i32 to index
    %309 = memref.load %arg1[%308] : memref<64xi32, #tpu.memory_space<smem>>
    %310 = arith.index_cast %309 : i32 to index
    %c0_111 = arith.constant 0 : index
    %311 = vector.load %arg2[%310, %c0_111] : memref<32x128xf32, #tpu.memory_space<vmem>>, vector<1x128xf32>
    %c8_i32_112 = arith.constant 8 : i32
    %312 = arith.muli %c3_i32_93, %c8_i32_112 : i32
    %313 = arith.addi %312, %0 : i32
    %c6_i32_113 = arith.constant 6 : i32
    %314 = arith.addi %313, %c6_i32_113 : i32
    %315 = arith.index_cast %314 : i32 to index
    %316 = memref.load %arg1[%315] : memref<64xi32, #tpu.memory_space<smem>>
    %317 = arith.index_cast %316 : i32 to index
    %c0_114 = arith.constant 0 : index
    %318 = vector.load %arg2[%317, %c0_114] : memref<32x128xf32, #tpu.memory_space<vmem>>, vector<1x128xf32>
    %c8_i32_115 = arith.constant 8 : i32
    %319 = arith.muli %c3_i32_93, %c8_i32_115 : i32
    %320 = arith.addi %319, %0 : i32
    %c7_i32_116 = arith.constant 7 : i32
    %321 = arith.addi %320, %c7_i32_116 : i32
    %322 = arith.index_cast %321 : i32 to index
    %323 = memref.load %arg1[%322] : memref<64xi32, #tpu.memory_space<smem>>
    %324 = arith.index_cast %323 : i32 to index
    %c0_117 = arith.constant 0 : index
    %325 = vector.load %arg2[%324, %c0_117] : memref<32x128xf32, #tpu.memory_space<vmem>>, vector<1x128xf32>
    %326 = tpu.concatenate %276, %283, %290, %297, %304, %311, %318, %325 in 0 : vector<1x128xf32>, vector<1x128xf32>, vector<1x128xf32>, vector<1x128xf32>, vector<1x128xf32>, vector<1x128xf32>, vector<1x128xf32>, vector<1x128xf32> -> vector<8x128xf32>
    %c0_118 = arith.constant 0 : index
    %c0_119 = arith.constant 0 : index
    %327 = vector.load %arg3[%c0_118, %c0_119] : memref<32x128xf32, #tpu.memory_space<vmem>>, vector<32x128xf32>
    %cst_120 = arith.constant dense<0.000000e+00> : vector<8x128xf32>
    %328 = tpu.matmul %265, %327, %cst_120 {dimension_numbers = #tpu.dot_dimension_numbers<[1], [0], [0], [1], [0, 0, 1, 1], [], []>} : vector<8x32xf32>, vector<32x128xf32>, vector<8x128xf32> -> vector<8x128xf32>
    %329 = arith.addf %326, %328 : vector<8x128xf32>
    %330 = vector.extract_strided_slice %329 {offsets = [0, 0], sizes = [8, 32], strides = [1, 1]} : vector<8x128xf32> to vector<8x32xf32>
    %331 = arith.negf %330 : vector<8x32xf32>
    %332 = math.exp %331 : vector<8x32xf32>
    %cst_121 = arith.constant 1.000000e+00 : f32
    %333 = vector.broadcast %cst_121 : f32 to vector<8x32xf32>
    %334 = arith.addf %333, %332 : vector<8x32xf32>
    %335 = arith.divf %333, %334 : vector<8x32xf32>
    %336 = vector.extract_strided_slice %329 {offsets = [0, 32], sizes = [8, 32], strides = [1, 1]} : vector<8x128xf32> to vector<8x32xf32>
    %337 = arith.negf %336 : vector<8x32xf32>
    %338 = math.exp %337 : vector<8x32xf32>
    %cst_122 = arith.constant 1.000000e+00 : f32
    %339 = vector.broadcast %cst_122 : f32 to vector<8x32xf32>
    %340 = arith.addf %339, %338 : vector<8x32xf32>
    %341 = arith.divf %339, %340 : vector<8x32xf32>
    %342 = vector.extract_strided_slice %329 {offsets = [0, 64], sizes = [8, 32], strides = [1, 1]} : vector<8x128xf32> to vector<8x32xf32>
    %343 = math.tanh %342 : vector<8x32xf32>
    %344 = vector.extract_strided_slice %329 {offsets = [0, 96], sizes = [8, 32], strides = [1, 1]} : vector<8x128xf32> to vector<8x32xf32>
    %345 = arith.negf %344 : vector<8x32xf32>
    %346 = math.exp %345 : vector<8x32xf32>
    %cst_123 = arith.constant 1.000000e+00 : f32
    %347 = vector.broadcast %cst_123 : f32 to vector<8x32xf32>
    %348 = arith.addf %347, %346 : vector<8x32xf32>
    %349 = arith.divf %347, %348 : vector<8x32xf32>
    %350 = arith.mulf %341, %263 : vector<8x32xf32>
    %351 = arith.mulf %335, %343 : vector<8x32xf32>
    %352 = arith.addf %350, %351 : vector<8x32xf32>
    %353 = math.tanh %352 : vector<8x32xf32>
    %354 = arith.mulf %349, %353 : vector<8x32xf32>
    %c8_i32_124 = arith.constant 8 : i32
    %355 = arith.muli %c3_i32_93, %c8_i32_124 : i32
    %356 = tpu.assume_multiple %355, 8 : i32
    %357 = arith.index_cast %356 : i32 to index
    %c0_125 = arith.constant 0 : index
    %358 = vector.load %arg11[%357, %c0_125] : memref<64x32xf32, #tpu.memory_space<vmem>>, vector<8x32xf32>
    tpu.vector_store %arg11[%357, %c0_125], %354 {strides = array<i32>} : memref<64x32xf32, #tpu.memory_space<vmem>>, vector<8x32xf32>,
    %c4_i32_126 = arith.constant 4 : i32
    %c8_i32_127 = arith.constant 8 : i32
    %359 = arith.muli %c4_i32_126, %c8_i32_127 : i32
    %360 = arith.addi %359, %0 : i32
    %c0_i32_128 = arith.constant 0 : i32
    %361 = arith.addi %360, %c0_i32_128 : i32
    %362 = arith.index_cast %361 : i32 to index
    %363 = memref.load %arg1[%362] : memref<64xi32, #tpu.memory_space<smem>>
    %364 = arith.index_cast %363 : i32 to index
    %c0_129 = arith.constant 0 : index
    %365 = vector.load %arg2[%364, %c0_129] : memref<32x128xf32, #tpu.memory_space<vmem>>, vector<1x128xf32>
    %c8_i32_130 = arith.constant 8 : i32
    %366 = arith.muli %c4_i32_126, %c8_i32_130 : i32
    %367 = arith.addi %366, %0 : i32
    %c1_i32_131 = arith.constant 1 : i32
    %368 = arith.addi %367, %c1_i32_131 : i32
    %369 = arith.index_cast %368 : i32 to index
    %370 = memref.load %arg1[%369] : memref<64xi32, #tpu.memory_space<smem>>
    %371 = arith.index_cast %370 : i32 to index
    %c0_132 = arith.constant 0 : index
    %372 = vector.load %arg2[%371, %c0_132] : memref<32x128xf32, #tpu.memory_space<vmem>>, vector<1x128xf32>
    %c8_i32_133 = arith.constant 8 : i32
    %373 = arith.muli %c4_i32_126, %c8_i32_133 : i32
    %374 = arith.addi %373, %0 : i32
    %c2_i32_134 = arith.constant 2 : i32
    %375 = arith.addi %374, %c2_i32_134 : i32
    %376 = arith.index_cast %375 : i32 to index
    %377 = memref.load %arg1[%376] : memref<64xi32, #tpu.memory_space<smem>>
    %378 = arith.index_cast %377 : i32 to index
    %c0_135 = arith.constant 0 : index
    %379 = vector.load %arg2[%378, %c0_135] : memref<32x128xf32, #tpu.memory_space<vmem>>, vector<1x128xf32>
    %c8_i32_136 = arith.constant 8 : i32
    %380 = arith.muli %c4_i32_126, %c8_i32_136 : i32
    %381 = arith.addi %380, %0 : i32
    %c3_i32_137 = arith.constant 3 : i32
    %382 = arith.addi %381, %c3_i32_137 : i32
    %383 = arith.index_cast %382 : i32 to index
    %384 = memref.load %arg1[%383] : memref<64xi32, #tpu.memory_space<smem>>
    %385 = arith.index_cast %384 : i32 to index
    %c0_138 = arith.constant 0 : index
    %386 = vector.load %arg2[%385, %c0_138] : memref<32x128xf32, #tpu.memory_space<vmem>>, vector<1x128xf32>
    %c8_i32_139 = arith.constant 8 : i32
    %387 = arith.muli %c4_i32_126, %c8_i32_139 : i32
    %388 = arith.addi %387, %0 : i32
    %c4_i32_140 = arith.constant 4 : i32
    %389 = arith.addi %388, %c4_i32_140 : i32
    %390 = arith.index_cast %389 : i32 to index
    %391 = memref.load %arg1[%390] : memref<64xi32, #tpu.memory_space<smem>>
    %392 = arith.index_cast %391 : i32 to index
    %c0_141 = arith.constant 0 : index
    %393 = vector.load %arg2[%392, %c0_141] : memref<32x128xf32, #tpu.memory_space<vmem>>, vector<1x128xf32>
    %c8_i32_142 = arith.constant 8 : i32
    %394 = arith.muli %c4_i32_126, %c8_i32_142 : i32
    %395 = arith.addi %394, %0 : i32
    %c5_i32_143 = arith.constant 5 : i32
    %396 = arith.addi %395, %c5_i32_143 : i32
    %397 = arith.index_cast %396 : i32 to index
    %398 = memref.load %arg1[%397] : memref<64xi32, #tpu.memory_space<smem>>
    %399 = arith.index_cast %398 : i32 to index
    %c0_144 = arith.constant 0 : index
    %400 = vector.load %arg2[%399, %c0_144] : memref<32x128xf32, #tpu.memory_space<vmem>>, vector<1x128xf32>
    %c8_i32_145 = arith.constant 8 : i32
    %401 = arith.muli %c4_i32_126, %c8_i32_145 : i32
    %402 = arith.addi %401, %0 : i32
    %c6_i32_146 = arith.constant 6 : i32
    %403 = arith.addi %402, %c6_i32_146 : i32
    %404 = arith.index_cast %403 : i32 to index
    %405 = memref.load %arg1[%404] : memref<64xi32, #tpu.memory_space<smem>>
    %406 = arith.index_cast %405 : i32 to index
    %c0_147 = arith.constant 0 : index
    %407 = vector.load %arg2[%406, %c0_147] : memref<32x128xf32, #tpu.memory_space<vmem>>, vector<1x128xf32>
    %c8_i32_148 = arith.constant 8 : i32
    %408 = arith.muli %c4_i32_126, %c8_i32_148 : i32
    %409 = arith.addi %408, %0 : i32
    %c7_i32_149 = arith.constant 7 : i32
    %410 = arith.addi %409, %c7_i32_149 : i32
    %411 = arith.index_cast %410 : i32 to index
    %412 = memref.load %arg1[%411] : memref<64xi32, #tpu.memory_space<smem>>
    %413 = arith.index_cast %412 : i32 to index
    %c0_150 = arith.constant 0 : index
    %414 = vector.load %arg2[%413, %c0_150] : memref<32x128xf32, #tpu.memory_space<vmem>>, vector<1x128xf32>
    %415 = tpu.concatenate %365, %372, %379, %386, %393, %400, %407, %414 in 0 : vector<1x128xf32>, vector<1x128xf32>, vector<1x128xf32>, vector<1x128xf32>, vector<1x128xf32>, vector<1x128xf32>, vector<1x128xf32>, vector<1x128xf32> -> vector<8x128xf32>
    %c0_151 = arith.constant 0 : index
    %c0_152 = arith.constant 0 : index
    %416 = vector.load %arg3[%c0_151, %c0_152] : memref<32x128xf32, #tpu.memory_space<vmem>>, vector<32x128xf32>
    %cst_153 = arith.constant dense<0.000000e+00> : vector<8x128xf32>
    %417 = tpu.matmul %354, %416, %cst_153 {dimension_numbers = #tpu.dot_dimension_numbers<[1], [0], [0], [1], [0, 0, 1, 1], [], []>} : vector<8x32xf32>, vector<32x128xf32>, vector<8x128xf32> -> vector<8x128xf32>
    %418 = arith.addf %415, %417 : vector<8x128xf32>
    %419 = vector.extract_strided_slice %418 {offsets = [0, 0], sizes = [8, 32], strides = [1, 1]} : vector<8x128xf32> to vector<8x32xf32>
    %420 = arith.negf %419 : vector<8x32xf32>
    %421 = math.exp %420 : vector<8x32xf32>
    %cst_154 = arith.constant 1.000000e+00 : f32
    %422 = vector.broadcast %cst_154 : f32 to vector<8x32xf32>
    %423 = arith.addf %422, %421 : vector<8x32xf32>
    %424 = arith.divf %422, %423 : vector<8x32xf32>
    %425 = vector.extract_strided_slice %418 {offsets = [0, 32], sizes = [8, 32], strides = [1, 1]} : vector<8x128xf32> to vector<8x32xf32>
    %426 = arith.negf %425 : vector<8x32xf32>
    %427 = math.exp %426 : vector<8x32xf32>
    %cst_155 = arith.constant 1.000000e+00 : f32
    %428 = vector.broadcast %cst_155 : f32 to vector<8x32xf32>
    %429 = arith.addf %428, %427 : vector<8x32xf32>
    %430 = arith.divf %428, %429 : vector<8x32xf32>
    %431 = vector.extract_strided_slice %418 {offsets = [0, 64], sizes = [8, 32], strides = [1, 1]} : vector<8x128xf32> to vector<8x32xf32>
    %432 = math.tanh %431 : vector<8x32xf32>
    %433 = vector.extract_strided_slice %418 {offsets = [0, 96], sizes = [8, 32], strides = [1, 1]} : vector<8x128xf32> to vector<8x32xf32>
    %434 = arith.negf %433 : vector<8x32xf32>
    %435 = math.exp %434 : vector<8x32xf32>
    %cst_156 = arith.constant 1.000000e+00 : f32
    %436 = vector.broadcast %cst_156 : f32 to vector<8x32xf32>
    %437 = arith.addf %436, %435 : vector<8x32xf32>
    %438 = arith.divf %436, %437 : vector<8x32xf32>
    %439 = arith.mulf %430, %352 : vector<8x32xf32>
    %440 = arith.mulf %424, %432 : vector<8x32xf32>
    %441 = arith.addf %439, %440 : vector<8x32xf32>
    %442 = math.tanh %441 : vector<8x32xf32>
    %443 = arith.mulf %438, %442 : vector<8x32xf32>
    %c8_i32_157 = arith.constant 8 : i32
    %444 = arith.muli %c4_i32_126, %c8_i32_157 : i32
    %445 = tpu.assume_multiple %444, 8 : i32
    %446 = arith.index_cast %445 : i32 to index
    %c0_158 = arith.constant 0 : index
    %447 = vector.load %arg11[%446, %c0_158] : memref<64x32xf32, #tpu.memory_space<vmem>>, vector<8x32xf32>
    tpu.vector_store %arg11[%446, %c0_158], %443 {strides = array<i32>} : memref<64x32xf32, #tpu.memory_space<vmem>>, vector<8x32xf32>,
    %c5_i32_159 = arith.constant 5 : i32
    %c8_i32_160 = arith.constant 8 : i32
    %448 = arith.muli %c5_i32_159, %c8_i32_160 : i32
    %449 = arith.addi %448, %0 : i32
    %c0_i32_161 = arith.constant 0 : i32
    %450 = arith.addi %449, %c0_i32_161 : i32
    %451 = arith.index_cast %450 : i32 to index
    %452 = memref.load %arg1[%451] : memref<64xi32, #tpu.memory_space<smem>>
    %453 = arith.index_cast %452 : i32 to index
    %c0_162 = arith.constant 0 : index
    %454 = vector.load %arg2[%453, %c0_162] : memref<32x128xf32, #tpu.memory_space<vmem>>, vector<1x128xf32>
    %c8_i32_163 = arith.constant 8 : i32
    %455 = arith.muli %c5_i32_159, %c8_i32_163 : i32
    %456 = arith.addi %455, %0 : i32
    %c1_i32_164 = arith.constant 1 : i32
    %457 = arith.addi %456, %c1_i32_164 : i32
    %458 = arith.index_cast %457 : i32 to index
    %459 = memref.load %arg1[%458] : memref<64xi32, #tpu.memory_space<smem>>
    %460 = arith.index_cast %459 : i32 to index
    %c0_165 = arith.constant 0 : index
    %461 = vector.load %arg2[%460, %c0_165] : memref<32x128xf32, #tpu.memory_space<vmem>>, vector<1x128xf32>
    %c8_i32_166 = arith.constant 8 : i32
    %462 = arith.muli %c5_i32_159, %c8_i32_166 : i32
    %463 = arith.addi %462, %0 : i32
    %c2_i32_167 = arith.constant 2 : i32
    %464 = arith.addi %463, %c2_i32_167 : i32
    %465 = arith.index_cast %464 : i32 to index
    %466 = memref.load %arg1[%465] : memref<64xi32, #tpu.memory_space<smem>>
    %467 = arith.index_cast %466 : i32 to index
    %c0_168 = arith.constant 0 : index
    %468 = vector.load %arg2[%467, %c0_168] : memref<32x128xf32, #tpu.memory_space<vmem>>, vector<1x128xf32>
    %c8_i32_169 = arith.constant 8 : i32
    %469 = arith.muli %c5_i32_159, %c8_i32_169 : i32
    %470 = arith.addi %469, %0 : i32
    %c3_i32_170 = arith.constant 3 : i32
    %471 = arith.addi %470, %c3_i32_170 : i32
    %472 = arith.index_cast %471 : i32 to index
    %473 = memref.load %arg1[%472] : memref<64xi32, #tpu.memory_space<smem>>
    %474 = arith.index_cast %473 : i32 to index
    %c0_171 = arith.constant 0 : index
    %475 = vector.load %arg2[%474, %c0_171] : memref<32x128xf32, #tpu.memory_space<vmem>>, vector<1x128xf32>
    %c8_i32_172 = arith.constant 8 : i32
    %476 = arith.muli %c5_i32_159, %c8_i32_172 : i32
    %477 = arith.addi %476, %0 : i32
    %c4_i32_173 = arith.constant 4 : i32
    %478 = arith.addi %477, %c4_i32_173 : i32
    %479 = arith.index_cast %478 : i32 to index
    %480 = memref.load %arg1[%479] : memref<64xi32, #tpu.memory_space<smem>>
    %481 = arith.index_cast %480 : i32 to index
    %c0_174 = arith.constant 0 : index
    %482 = vector.load %arg2[%481, %c0_174] : memref<32x128xf32, #tpu.memory_space<vmem>>, vector<1x128xf32>
    %c8_i32_175 = arith.constant 8 : i32
    %483 = arith.muli %c5_i32_159, %c8_i32_175 : i32
    %484 = arith.addi %483, %0 : i32
    %c5_i32_176 = arith.constant 5 : i32
    %485 = arith.addi %484, %c5_i32_176 : i32
    %486 = arith.index_cast %485 : i32 to index
    %487 = memref.load %arg1[%486] : memref<64xi32, #tpu.memory_space<smem>>
    %488 = arith.index_cast %487 : i32 to index
    %c0_177 = arith.constant 0 : index
    %489 = vector.load %arg2[%488, %c0_177] : memref<32x128xf32, #tpu.memory_space<vmem>>, vector<1x128xf32>
    %c8_i32_178 = arith.constant 8 : i32
    %490 = arith.muli %c5_i32_159, %c8_i32_178 : i32
    %491 = arith.addi %490, %0 : i32
    %c6_i32_179 = arith.constant 6 : i32
    %492 = arith.addi %491, %c6_i32_179 : i32
    %493 = arith.index_cast %492 : i32 to index
    %494 = memref.load %arg1[%493] : memref<64xi32, #tpu.memory_space<smem>>
    %495 = arith.index_cast %494 : i32 to index
    %c0_180 = arith.constant 0 : index
    %496 = vector.load %arg2[%495, %c0_180] : memref<32x128xf32, #tpu.memory_space<vmem>>, vector<1x128xf32>
    %c8_i32_181 = arith.constant 8 : i32
    %497 = arith.muli %c5_i32_159, %c8_i32_181 : i32
    %498 = arith.addi %497, %0 : i32
    %c7_i32_182 = arith.constant 7 : i32
    %499 = arith.addi %498, %c7_i32_182 : i32
    %500 = arith.index_cast %499 : i32 to index
    %501 = memref.load %arg1[%500] : memref<64xi32, #tpu.memory_space<smem>>
    %502 = arith.index_cast %501 : i32 to index
    %c0_183 = arith.constant 0 : index
    %503 = vector.load %arg2[%502, %c0_183] : memref<32x128xf32, #tpu.memory_space<vmem>>, vector<1x128xf32>
    %504 = tpu.concatenate %454, %461, %468, %475, %482, %489, %496, %503 in 0 : vector<1x128xf32>, vector<1x128xf32>, vector<1x128xf32>, vector<1x128xf32>, vector<1x128xf32>, vector<1x128xf32>, vector<1x128xf32>, vector<1x128xf32> -> vector<8x128xf32>
    %c0_184 = arith.constant 0 : index
    %c0_185 = arith.constant 0 : index
    %505 = vector.load %arg3[%c0_184, %c0_185] : memref<32x128xf32, #tpu.memory_space<vmem>>, vector<32x128xf32>
    %cst_186 = arith.constant dense<0.000000e+00> : vector<8x128xf32>
    %506 = tpu.matmul %443, %505, %cst_186 {dimension_numbers = #tpu.dot_dimension_numbers<[1], [0], [0], [1], [0, 0, 1, 1], [], []>} : vector<8x32xf32>, vector<32x128xf32>, vector<8x128xf32> -> vector<8x128xf32>
    %507 = arith.addf %504, %506 : vector<8x128xf32>
    %508 = vector.extract_strided_slice %507 {offsets = [0, 0], sizes = [8, 32], strides = [1, 1]} : vector<8x128xf32> to vector<8x32xf32>
    %509 = arith.negf %508 : vector<8x32xf32>
    %510 = math.exp %509 : vector<8x32xf32>
    %cst_187 = arith.constant 1.000000e+00 : f32
    %511 = vector.broadcast %cst_187 : f32 to vector<8x32xf32>
    %512 = arith.addf %511, %510 : vector<8x32xf32>
    %513 = arith.divf %511, %512 : vector<8x32xf32>
    %514 = vector.extract_strided_slice %507 {offsets = [0, 32], sizes = [8, 32], strides = [1, 1]} : vector<8x128xf32> to vector<8x32xf32>
    %515 = arith.negf %514 : vector<8x32xf32>
    %516 = math.exp %515 : vector<8x32xf32>
    %cst_188 = arith.constant 1.000000e+00 : f32
    %517 = vector.broadcast %cst_188 : f32 to vector<8x32xf32>
    %518 = arith.addf %517, %516 : vector<8x32xf32>
    %519 = arith.divf %517, %518 : vector<8x32xf32>
    %520 = vector.extract_strided_slice %507 {offsets = [0, 64], sizes = [8, 32], strides = [1, 1]} : vector<8x128xf32> to vector<8x32xf32>
    %521 = math.tanh %520 : vector<8x32xf32>
    %522 = vector.extract_strided_slice %507 {offsets = [0, 96], sizes = [8, 32], strides = [1, 1]} : vector<8x128xf32> to vector<8x32xf32>
    %523 = arith.negf %522 : vector<8x32xf32>
    %524 = math.exp %523 : vector<8x32xf32>
    %cst_189 = arith.constant 1.000000e+00 : f32
    %525 = vector.broadcast %cst_189 : f32 to vector<8x32xf32>
    %526 = arith.addf %525, %524 : vector<8x32xf32>
    %527 = arith.divf %525, %526 : vector<8x32xf32>
    %528 = arith.mulf %519, %441 : vector<8x32xf32>
    %529 = arith.mulf %513, %521 : vector<8x32xf32>
    %530 = arith.addf %528, %529 : vector<8x32xf32>
    %531 = math.tanh %530 : vector<8x32xf32>
    %532 = arith.mulf %527, %531 : vector<8x32xf32>
    %c8_i32_190 = arith.constant 8 : i32
    %533 = arith.muli %c5_i32_159, %c8_i32_190 : i32
    %534 = tpu.assume_multiple %533, 8 : i32
    %535 = arith.index_cast %534 : i32 to index
    %c0_191 = arith.constant 0 : index
    %536 = vector.load %arg11[%535, %c0_191] : memref<64x32xf32, #tpu.memory_space<vmem>>, vector<8x32xf32>
    tpu.vector_store %arg11[%535, %c0_191], %532 {strides = array<i32>} : memref<64x32xf32, #tpu.memory_space<vmem>>, vector<8x32xf32>,
    %c6_i32_192 = arith.constant 6 : i32
    %c8_i32_193 = arith.constant 8 : i32
    %537 = arith.muli %c6_i32_192, %c8_i32_193 : i32
    %538 = arith.addi %537, %0 : i32
    %c0_i32_194 = arith.constant 0 : i32
    %539 = arith.addi %538, %c0_i32_194 : i32
    %540 = arith.index_cast %539 : i32 to index
    %541 = memref.load %arg1[%540] : memref<64xi32, #tpu.memory_space<smem>>
    %542 = arith.index_cast %541 : i32 to index
    %c0_195 = arith.constant 0 : index
    %543 = vector.load %arg2[%542, %c0_195] : memref<32x128xf32, #tpu.memory_space<vmem>>, vector<1x128xf32>
    %c8_i32_196 = arith.constant 8 : i32
    %544 = arith.muli %c6_i32_192, %c8_i32_196 : i32
    %545 = arith.addi %544, %0 : i32
    %c1_i32_197 = arith.constant 1 : i32
    %546 = arith.addi %545, %c1_i32_197 : i32
    %547 = arith.index_cast %546 : i32 to index
    %548 = memref.load %arg1[%547] : memref<64xi32, #tpu.memory_space<smem>>
    %549 = arith.index_cast %548 : i32 to index
    %c0_198 = arith.constant 0 : index
    %550 = vector.load %arg2[%549, %c0_198] : memref<32x128xf32, #tpu.memory_space<vmem>>, vector<1x128xf32>
    %c8_i32_199 = arith.constant 8 : i32
    %551 = arith.muli %c6_i32_192, %c8_i32_199 : i32
    %552 = arith.addi %551, %0 : i32
    %c2_i32_200 = arith.constant 2 : i32
    %553 = arith.addi %552, %c2_i32_200 : i32
    %554 = arith.index_cast %553 : i32 to index
    %555 = memref.load %arg1[%554] : memref<64xi32, #tpu.memory_space<smem>>
    %556 = arith.index_cast %555 : i32 to index
    %c0_201 = arith.constant 0 : index
    %557 = vector.load %arg2[%556, %c0_201] : memref<32x128xf32, #tpu.memory_space<vmem>>, vector<1x128xf32>
    %c8_i32_202 = arith.constant 8 : i32
    %558 = arith.muli %c6_i32_192, %c8_i32_202 : i32
    %559 = arith.addi %558, %0 : i32
    %c3_i32_203 = arith.constant 3 : i32
    %560 = arith.addi %559, %c3_i32_203 : i32
    %561 = arith.index_cast %560 : i32 to index
    %562 = memref.load %arg1[%561] : memref<64xi32, #tpu.memory_space<smem>>
    %563 = arith.index_cast %562 : i32 to index
    %c0_204 = arith.constant 0 : index
    %564 = vector.load %arg2[%563, %c0_204] : memref<32x128xf32, #tpu.memory_space<vmem>>, vector<1x128xf32>
    %c8_i32_205 = arith.constant 8 : i32
    %565 = arith.muli %c6_i32_192, %c8_i32_205 : i32
    %566 = arith.addi %565, %0 : i32
    %c4_i32_206 = arith.constant 4 : i32
    %567 = arith.addi %566, %c4_i32_206 : i32
    %568 = arith.index_cast %567 : i32 to index
    %569 = memref.load %arg1[%568] : memref<64xi32, #tpu.memory_space<smem>>
    %570 = arith.index_cast %569 : i32 to index
    %c0_207 = arith.constant 0 : index
    %571 = vector.load %arg2[%570, %c0_207] : memref<32x128xf32, #tpu.memory_space<vmem>>, vector<1x128xf32>
    %c8_i32_208 = arith.constant 8 : i32
    %572 = arith.muli %c6_i32_192, %c8_i32_208 : i32
    %573 = arith.addi %572, %0 : i32
    %c5_i32_209 = arith.constant 5 : i32
    %574 = arith.addi %573, %c5_i32_209 : i32
    %575 = arith.index_cast %574 : i32 to index
    %576 = memref.load %arg1[%575] : memref<64xi32, #tpu.memory_space<smem>>
    %577 = arith.index_cast %576 : i32 to index
    %c0_210 = arith.constant 0 : index
    %578 = vector.load %arg2[%577, %c0_210] : memref<32x128xf32, #tpu.memory_space<vmem>>, vector<1x128xf32>
    %c8_i32_211 = arith.constant 8 : i32
    %579 = arith.muli %c6_i32_192, %c8_i32_211 : i32
    %580 = arith.addi %579, %0 : i32
    %c6_i32_212 = arith.constant 6 : i32
    %581 = arith.addi %580, %c6_i32_212 : i32
    %582 = arith.index_cast %581 : i32 to index
    %583 = memref.load %arg1[%582] : memref<64xi32, #tpu.memory_space<smem>>
    %584 = arith.index_cast %583 : i32 to index
    %c0_213 = arith.constant 0 : index
    %585 = vector.load %arg2[%584, %c0_213] : memref<32x128xf32, #tpu.memory_space<vmem>>, vector<1x128xf32>
    %c8_i32_214 = arith.constant 8 : i32
    %586 = arith.muli %c6_i32_192, %c8_i32_214 : i32
    %587 = arith.addi %586, %0 : i32
    %c7_i32_215 = arith.constant 7 : i32
    %588 = arith.addi %587, %c7_i32_215 : i32
    %589 = arith.index_cast %588 : i32 to index
    %590 = memref.load %arg1[%589] : memref<64xi32, #tpu.memory_space<smem>>
    %591 = arith.index_cast %590 : i32 to index
    %c0_216 = arith.constant 0 : index
    %592 = vector.load %arg2[%591, %c0_216] : memref<32x128xf32, #tpu.memory_space<vmem>>, vector<1x128xf32>
    %593 = tpu.concatenate %543, %550, %557, %564, %571, %578, %585, %592 in 0 : vector<1x128xf32>, vector<1x128xf32>, vector<1x128xf32>, vector<1x128xf32>, vector<1x128xf32>, vector<1x128xf32>, vector<1x128xf32>, vector<1x128xf32> -> vector<8x128xf32>
    %c0_217 = arith.constant 0 : index
    %c0_218 = arith.constant 0 : index
    %594 = vector.load %arg3[%c0_217, %c0_218] : memref<32x128xf32, #tpu.memory_space<vmem>>, vector<32x128xf32>
    %cst_219 = arith.constant dense<0.000000e+00> : vector<8x128xf32>
    %595 = tpu.matmul %532, %594, %cst_219 {dimension_numbers = #tpu.dot_dimension_numbers<[1], [0], [0], [1], [0, 0, 1, 1], [], []>} : vector<8x32xf32>, vector<32x128xf32>, vector<8x128xf32> -> vector<8x128xf32>
    %596 = arith.addf %593, %595 : vector<8x128xf32>
    %597 = vector.extract_strided_slice %596 {offsets = [0, 0], sizes = [8, 32], strides = [1, 1]} : vector<8x128xf32> to vector<8x32xf32>
    %598 = arith.negf %597 : vector<8x32xf32>
    %599 = math.exp %598 : vector<8x32xf32>
    %cst_220 = arith.constant 1.000000e+00 : f32
    %600 = vector.broadcast %cst_220 : f32 to vector<8x32xf32>
    %601 = arith.addf %600, %599 : vector<8x32xf32>
    %602 = arith.divf %600, %601 : vector<8x32xf32>
    %603 = vector.extract_strided_slice %596 {offsets = [0, 32], sizes = [8, 32], strides = [1, 1]} : vector<8x128xf32> to vector<8x32xf32>
    %604 = arith.negf %603 : vector<8x32xf32>
    %605 = math.exp %604 : vector<8x32xf32>
    %cst_221 = arith.constant 1.000000e+00 : f32
    %606 = vector.broadcast %cst_221 : f32 to vector<8x32xf32>
    %607 = arith.addf %606, %605 : vector<8x32xf32>
    %608 = arith.divf %606, %607 : vector<8x32xf32>
    %609 = vector.extract_strided_slice %596 {offsets = [0, 64], sizes = [8, 32], strides = [1, 1]} : vector<8x128xf32> to vector<8x32xf32>
    %610 = math.tanh %609 : vector<8x32xf32>
    %611 = vector.extract_strided_slice %596 {offsets = [0, 96], sizes = [8, 32], strides = [1, 1]} : vector<8x128xf32> to vector<8x32xf32>
    %612 = arith.negf %611 : vector<8x32xf32>
    %613 = math.exp %612 : vector<8x32xf32>
    %cst_222 = arith.constant 1.000000e+00 : f32
    %614 = vector.broadcast %cst_222 : f32 to vector<8x32xf32>
    %615 = arith.addf %614, %613 : vector<8x32xf32>
    %616 = arith.divf %614, %615 : vector<8x32xf32>
    %617 = arith.mulf %608, %530 : vector<8x32xf32>
    %618 = arith.mulf %602, %610 : vector<8x32xf32>
    %619 = arith.addf %617, %618 : vector<8x32xf32>
    %620 = math.tanh %619 : vector<8x32xf32>
    %621 = arith.mulf %616, %620 : vector<8x32xf32>
    %c8_i32_223 = arith.constant 8 : i32
    %622 = arith.muli %c6_i32_192, %c8_i32_223 : i32
    %623 = tpu.assume_multiple %622, 8 : i32
    %624 = arith.index_cast %623 : i32 to index
    %c0_224 = arith.constant 0 : index
    %625 = vector.load %arg11[%624, %c0_224] : memref<64x32xf32, #tpu.memory_space<vmem>>, vector<8x32xf32>
    tpu.vector_store %arg11[%624, %c0_224], %621 {strides = array<i32>} : memref<64x32xf32, #tpu.memory_space<vmem>>, vector<8x32xf32>,
    %c7_i32_225 = arith.constant 7 : i32
    %c8_i32_226 = arith.constant 8 : i32
    %626 = arith.muli %c7_i32_225, %c8_i32_226 : i32
    %627 = arith.addi %626, %0 : i32
    %c0_i32_227 = arith.constant 0 : i32
    %628 = arith.addi %627, %c0_i32_227 : i32
    %629 = arith.index_cast %628 : i32 to index
    %630 = memref.load %arg1[%629] : memref<64xi32, #tpu.memory_space<smem>>
    %631 = arith.index_cast %630 : i32 to index
    %c0_228 = arith.constant 0 : index
    %632 = vector.load %arg2[%631, %c0_228] : memref<32x128xf32, #tpu.memory_space<vmem>>, vector<1x128xf32>
    %c8_i32_229 = arith.constant 8 : i32
    %633 = arith.muli %c7_i32_225, %c8_i32_229 : i32
    %634 = arith.addi %633, %0 : i32
    %c1_i32_230 = arith.constant 1 : i32
    %635 = arith.addi %634, %c1_i32_230 : i32
    %636 = arith.index_cast %635 : i32 to index
    %637 = memref.load %arg1[%636] : memref<64xi32, #tpu.memory_space<smem>>
    %638 = arith.index_cast %637 : i32 to index
    %c0_231 = arith.constant 0 : index
    %639 = vector.load %arg2[%638, %c0_231] : memref<32x128xf32, #tpu.memory_space<vmem>>, vector<1x128xf32>
    %c8_i32_232 = arith.constant 8 : i32
    %640 = arith.muli %c7_i32_225, %c8_i32_232 : i32
    %641 = arith.addi %640, %0 : i32
    %c2_i32_233 = arith.constant 2 : i32
    %642 = arith.addi %641, %c2_i32_233 : i32
    %643 = arith.index_cast %642 : i32 to index
    %644 = memref.load %arg1[%643] : memref<64xi32, #tpu.memory_space<smem>>
    %645 = arith.index_cast %644 : i32 to index
    %c0_234 = arith.constant 0 : index
    %646 = vector.load %arg2[%645, %c0_234] : memref<32x128xf32, #tpu.memory_space<vmem>>, vector<1x128xf32>
    %c8_i32_235 = arith.constant 8 : i32
    %647 = arith.muli %c7_i32_225, %c8_i32_235 : i32
    %648 = arith.addi %647, %0 : i32
    %c3_i32_236 = arith.constant 3 : i32
    %649 = arith.addi %648, %c3_i32_236 : i32
    %650 = arith.index_cast %649 : i32 to index
    %651 = memref.load %arg1[%650] : memref<64xi32, #tpu.memory_space<smem>>
    %652 = arith.index_cast %651 : i32 to index
    %c0_237 = arith.constant 0 : index
    %653 = vector.load %arg2[%652, %c0_237] : memref<32x128xf32, #tpu.memory_space<vmem>>, vector<1x128xf32>
    %c8_i32_238 = arith.constant 8 : i32
    %654 = arith.muli %c7_i32_225, %c8_i32_238 : i32
    %655 = arith.addi %654, %0 : i32
    %c4_i32_239 = arith.constant 4 : i32
    %656 = arith.addi %655, %c4_i32_239 : i32
    %657 = arith.index_cast %656 : i32 to index
    %658 = memref.load %arg1[%657] : memref<64xi32, #tpu.memory_space<smem>>
    %659 = arith.index_cast %658 : i32 to index
    %c0_240 = arith.constant 0 : index
    %660 = vector.load %arg2[%659, %c0_240] : memref<32x128xf32, #tpu.memory_space<vmem>>, vector<1x128xf32>
    %c8_i32_241 = arith.constant 8 : i32
    %661 = arith.muli %c7_i32_225, %c8_i32_241 : i32
    %662 = arith.addi %661, %0 : i32
    %c5_i32_242 = arith.constant 5 : i32
    %663 = arith.addi %662, %c5_i32_242 : i32
    %664 = arith.index_cast %663 : i32 to index
    %665 = memref.load %arg1[%664] : memref<64xi32, #tpu.memory_space<smem>>
    %666 = arith.index_cast %665 : i32 to index
    %c0_243 = arith.constant 0 : index
    %667 = vector.load %arg2[%666, %c0_243] : memref<32x128xf32, #tpu.memory_space<vmem>>, vector<1x128xf32>
    %c8_i32_244 = arith.constant 8 : i32
    %668 = arith.muli %c7_i32_225, %c8_i32_244 : i32
    %669 = arith.addi %668, %0 : i32
    %c6_i32_245 = arith.constant 6 : i32
    %670 = arith.addi %669, %c6_i32_245 : i32
    %671 = arith.index_cast %670 : i32 to index
    %672 = memref.load %arg1[%671] : memref<64xi32, #tpu.memory_space<smem>>
    %673 = arith.index_cast %672 : i32 to index
    %c0_246 = arith.constant 0 : index
    %674 = vector.load %arg2[%673, %c0_246] : memref<32x128xf32, #tpu.memory_space<vmem>>, vector<1x128xf32>
    %c8_i32_247 = arith.constant 8 : i32
    %675 = arith.muli %c7_i32_225, %c8_i32_247 : i32
    %676 = arith.addi %675, %0 : i32
    %c7_i32_248 = arith.constant 7 : i32
    %677 = arith.addi %676, %c7_i32_248 : i32
    %678 = arith.index_cast %677 : i32 to index
    %679 = memref.load %arg1[%678] : memref<64xi32, #tpu.memory_space<smem>>
    %680 = arith.index_cast %679 : i32 to index
    %c0_249 = arith.constant 0 : index
    %681 = vector.load %arg2[%680, %c0_249] : memref<32x128xf32, #tpu.memory_space<vmem>>, vector<1x128xf32>
    %682 = tpu.concatenate %632, %639, %646, %653, %660, %667, %674, %681 in 0 : vector<1x128xf32>, vector<1x128xf32>, vector<1x128xf32>, vector<1x128xf32>, vector<1x128xf32>, vector<1x128xf32>, vector<1x128xf32>, vector<1x128xf32> -> vector<8x128xf32>
    %c0_250 = arith.constant 0 : index
    %c0_251 = arith.constant 0 : index
    %683 = vector.load %arg3[%c0_250, %c0_251] : memref<32x128xf32, #tpu.memory_space<vmem>>, vector<32x128xf32>
    %cst_252 = arith.constant dense<0.000000e+00> : vector<8x128xf32>
    %684 = tpu.matmul %621, %683, %cst_252 {dimension_numbers = #tpu.dot_dimension_numbers<[1], [0], [0], [1], [0, 0, 1, 1], [], []>} : vector<8x32xf32>, vector<32x128xf32>, vector<8x128xf32> -> vector<8x128xf32>
    %685 = arith.addf %682, %684 : vector<8x128xf32>
    %686 = vector.extract_strided_slice %685 {offsets = [0, 0], sizes = [8, 32], strides = [1, 1]} : vector<8x128xf32> to vector<8x32xf32>
    %687 = arith.negf %686 : vector<8x32xf32>
    %688 = math.exp %687 : vector<8x32xf32>
    %cst_253 = arith.constant 1.000000e+00 : f32
    %689 = vector.broadcast %cst_253 : f32 to vector<8x32xf32>
    %690 = arith.addf %689, %688 : vector<8x32xf32>
    %691 = arith.divf %689, %690 : vector<8x32xf32>
    %692 = vector.extract_strided_slice %685 {offsets = [0, 32], sizes = [8, 32], strides = [1, 1]} : vector<8x128xf32> to vector<8x32xf32>
    %693 = arith.negf %692 : vector<8x32xf32>
    %694 = math.exp %693 : vector<8x32xf32>
    %cst_254 = arith.constant 1.000000e+00 : f32
    %695 = vector.broadcast %cst_254 : f32 to vector<8x32xf32>
    %696 = arith.addf %695, %694 : vector<8x32xf32>
    %697 = arith.divf %695, %696 : vector<8x32xf32>
    %698 = vector.extract_strided_slice %685 {offsets = [0, 64], sizes = [8, 32], strides = [1, 1]} : vector<8x128xf32> to vector<8x32xf32>
    %699 = math.tanh %698 : vector<8x32xf32>
    %700 = vector.extract_strided_slice %685 {offsets = [0, 96], sizes = [8, 32], strides = [1, 1]} : vector<8x128xf32> to vector<8x32xf32>
    %701 = arith.negf %700 : vector<8x32xf32>
    %702 = math.exp %701 : vector<8x32xf32>
    %cst_255 = arith.constant 1.000000e+00 : f32
    %703 = vector.broadcast %cst_255 : f32 to vector<8x32xf32>
    %704 = arith.addf %703, %702 : vector<8x32xf32>
    %705 = arith.divf %703, %704 : vector<8x32xf32>
    %706 = arith.mulf %697, %619 : vector<8x32xf32>
    %707 = arith.mulf %691, %699 : vector<8x32xf32>
    %708 = arith.addf %706, %707 : vector<8x32xf32>
    %709 = math.tanh %708 : vector<8x32xf32>
    %710 = arith.mulf %705, %709 : vector<8x32xf32>
    %c8_i32_256 = arith.constant 8 : i32
    %711 = arith.muli %c7_i32_225, %c8_i32_256 : i32
    %712 = tpu.assume_multiple %711, 8 : i32
    %713 = arith.index_cast %712 : i32 to index
    %c0_257 = arith.constant 0 : index
    %714 = vector.load %arg11[%713, %c0_257] : memref<64x32xf32, #tpu.memory_space<vmem>>, vector<8x32xf32>
    tpu.vector_store %arg11[%713, %c0_257], %710 {strides = array<i32>} : memref<64x32xf32, #tpu.memory_space<vmem>>, vector<8x32xf32>,
    %c8_i32_258 = arith.constant 8 : i32
    %c0_259 = arith.constant 0 : index
    %c0_260 = arith.constant 0 : index
    %715 = vector.load %arg9[%c0_259, %c0_260] : memref<8x32xf32, #tpu.memory_space<vmem>>, vector<8x32xf32>
    tpu.vector_store %arg9[%c0_259, %c0_260], %710 {strides = array<i32>} : memref<8x32xf32, #tpu.memory_space<vmem>>, vector<8x32xf32>,
    %c0_261 = arith.constant 0 : index
    %c0_262 = arith.constant 0 : index
    %716 = vector.load %arg10[%c0_261, %c0_262] : memref<8x32xf32, #tpu.memory_space<vmem>>, vector<8x32xf32>
    tpu.vector_store %arg10[%c0_261, %c0_262], %708 {strides = array<i32>} : memref<8x32xf32, #tpu.memory_space<vmem>>, vector<8x32xf32>,
    %c0_263 = arith.constant 0 : index
    %c0_264 = arith.constant 0 : index
    %717 = vector.load %arg11[%c0_263, %c0_264] : memref<64x32xf32, #tpu.memory_space<vmem>>, vector<64x32xf32>
    %c0_265 = arith.constant 0 : index
    %c0_266 = arith.constant 0 : index
    %718 = vector.load %arg6[%c0_265, %c0_266] : memref<32x128xf32, #tpu.memory_space<vmem>>, vector<32x128xf32>
    %cst_267 = arith.constant dense<0.000000e+00> : vector<64x128xf32>
    %719 = tpu.matmul %717, %718, %cst_267 {dimension_numbers = #tpu.dot_dimension_numbers<[1], [0], [0], [1], [0, 0, 1, 1], [], []>} : vector<64x32xf32>, vector<32x128xf32>, vector<64x128xf32> -> vector<64x128xf32>
    %c0_268 = arith.constant 0 : index
    %c0_269 = arith.constant 0 : index
    %720 = vector.load %arg7[%c0_268, %c0_269] : memref<1x128xf32, #tpu.memory_space<vmem>>, vector<1x128xf32>
    %721 = vector.broadcast %720 : vector<1x128xf32> to vector<64x128xf32>
    %722 = arith.addf %719, %721 : vector<64x128xf32>
    %723 = vector.shape_cast %722 : vector<64x128xf32> to vector<8x8x128xf32>
    %c0_270 = arith.constant 0 : index
    %c0_271 = arith.constant 0 : index
    %c0_272 = arith.constant 0 : index
    %724 = vector.load %arg8[%c0_270, %c0_271, %c0_272] : memref<8x8x128xf32, #tpu.memory_space<vmem>>, vector<8x8x128xf32>
    tpu.vector_store %arg8[%c0_270, %c0_271, %c0_272], %723 {strides = array<i32>} : memref<8x8x128xf32, #tpu.memory_space<vmem>>, vector<8x8x128xf32>,
    return
  }
  func.func @transform_0(%arg0: i32, %arg1: memref<64xi32, #tpu.memory_space<smem>>) -> (i32, i32) {
    %c0_i32 = arith.constant 0 : i32
    %c0_i32_0 = arith.constant 0 : i32
    %c0_i32_1 = arith.constant 0 : i32
    return %c0_i32, %c0_i32_0 : i32, i32
  }
  func.func @transform_1(%arg0: i32, %arg1: memref<64xi32, #tpu.memory_space<smem>>) -> (i32, i32) {
    %c0_i32 = arith.constant 0 : i32
    %c0_i32_0 = arith.constant 0 : i32
    %c0_i32_1 = arith.constant 0 : i32
    return %c0_i32, %c0_i32_0 : i32, i32
  }
  func.func @transform_2(%arg0: i32, %arg1: memref<64xi32, #tpu.memory_space<smem>>) -> (i32, i32) {
    %c0_i32 = arith.constant 0 : i32
    %c0_i32_0 = arith.constant 0 : i32
    return %arg0, %c0_i32 : i32, i32
  }
  func.func @transform_3(%arg0: i32, %arg1: memref<64xi32, #tpu.memory_space<smem>>) -> (i32, i32) {
    %c0_i32 = arith.constant 0 : i32
    %c0_i32_0 = arith.constant 0 : i32
    return %arg0, %c0_i32 : i32, i32
  }
  func.func @transform_4(%arg0: i32, %arg1: memref<64xi32, #tpu.memory_space<smem>>) -> (i32, i32) {
    %c0_i32 = arith.constant 0 : i32
    %c0_i32_0 = arith.constant 0 : i32
    %c0_i32_1 = arith.constant 0 : i32
    return %c0_i32, %c0_i32_0 : i32, i32
  }
  func.func @transform_5(%arg0: i32, %arg1: memref<64xi32, #tpu.memory_space<smem>>) -> (i32, i32) {
    %c0_i32 = arith.constant 0 : i32
    %c0_i32_0 = arith.constant 0 : i32
    %c0_i32_1 = arith.constant 0 : i32
    return %c0_i32, %c0_i32_0 : i32, i32
  }
  func.func @transform_6(%arg0: i32, %arg1: memref<64xi32, #tpu.memory_space<smem>>) -> (i32, i32, i32) {
    %c0_i32 = arith.constant 0 : i32
    %c0_i32_0 = arith.constant 0 : i32
    %c0_i32_1 = arith.constant 0 : i32
    return %c0_i32, %arg0, %c0_i32_0 : i32, i32, i32
  }
  func.func @transform_7(%arg0: i32, %arg1: memref<64xi32, #tpu.memory_space<smem>>) -> (i32, i32) {
    %c0_i32 = arith.constant 0 : i32
    %c0_i32_0 = arith.constant 0 : i32
    return %arg0, %c0_i32 : i32, i32
  }
  func.func @transform_8(%arg0: i32, %arg1: memref<64xi32, #tpu.memory_space<smem>>) -> (i32, i32) {
    %c0_i32 = arith.constant 0 : i32
    %c0_i32_0 = arith.constant 0 : i32
    return %arg0, %c0_i32 : i32, i32
  }
}

</mosaic_0001>

<llo_original>
// kernel: tpu_custom_call.1
$region0: #{tpu_custom_call.1}
  #allocation0 [shape = 'u32[]', space=smem, size = 0x4, offset = 0x4, fixed_abs, tag = 'smem constant byte address 0x4 - core index']
  #allocation1 [shape = 'u32[144,128]{1,0:T(1,128)}', space=vmem, size = 0x12000, scoped, tag = 'internal scratch']
  #allocation2 [shape = 'f32[64,32]{1,0:T(8,128)}', space=vmem, size = 0x8000, scoped, tag = 'scratch operand']
  #allocation3 [shape = 's32[1]{0}', space=sflag, size = 0x4, scoped, tag = 'scoped memory for tpu_custom_call.1']
  #allocation4 [shape = 'u8[512]{0}', space=smem, size = 0x200, scoped, tag = 'prefetched SMEM operand 0']
  %s0 = inlined_call_operand.hbm [shape: s32[64], index: 0, kind: input, shape index: {}]
  %s1 = inlined_call_operand.hbm [shape: f32[32,128], index: 1, kind: input, shape index: {}]
  %s2 = inlined_call_operand.hbm [shape: f32[32,128], index: 2, kind: input, shape index: {}]
  %s3 = inlined_call_operand.vmem [shape: f32[8,32], index: 3, kind: input, shape index: {}]
  %s4 = inlined_call_operand.hbm [shape: f32[8,32], index: 4, kind: input, shape index: {}]
  %s5 = inlined_call_operand.hbm [shape: f32[32,128], index: 5, kind: input, shape index: {}]
  %s6 = inlined_call_operand.vmem [shape: f32[1,128], index: 6, kind: input, shape index: {}]
  %s7 = inlined_call_operand.hbm [shape: f32[8,8,128], index: 7, kind: output, shape index: {0}]
  %s8 = inlined_call_operand.hbm [shape: f32[8,32], index: 8, kind: output, shape index: {1}]
  %s9 = inlined_call_operand.hbm [shape: f32[8,32], index: 9, kind: output, shape index: {2}]
  %10 = xla_tuple %s7, %s8, %s9
  %s11 = sld [smem:[#allocation0]]
  $region66: #{tpu_custom_call.1} parent=0
    _
  %s13 = ssub.s32 1, %s11
  %s14 = scalar_select 0, %s13, %s11
  %16 = dma.hbm_to_smem %s0, 16, [#allocation4], [#allocation3]
  %17 = dma.done [#allocation3], 16
  %18 = sfence
  $region1: #{tpu_custom_call.1} parent=0
    #allocation5 [shape = 'u8[16384]{0}', space=vmem, size = 0x4000, scoped, tag = 'input window, operand 1, single buffered']
    #allocation6 [shape = 's32[1]{0}', space=sflag, size = 0x4, scoped, tag = 'scoped memory for tpu_custom_call.1']
    #allocation7 [shape = 's32[1]{0}', space=sflag, size = 0x4, scoped, tag = 'scoped memory for tpu_custom_call.1']
    #allocation8 [shape = 'u8[16384]{0}', space=vmem, size = 0x4000, scoped, tag = 'input window, operand 2, single buffered']
    #allocation9 [shape = 's32[1]{0}', space=sflag, size = 0x4, scoped, tag = 'scoped memory for tpu_custom_call.1']
    #allocation10 [shape = 'u8[4096]{0}', space=vmem, size = 0x1000, scoped, tag = 'input window, operand 4, single buffered']
    #allocation11 [shape = 'u8[16384]{0}', space=vmem, size = 0x4000, scoped, tag = 'input window, operand 5, single buffered']
    #allocation12 [shape = 's32[1]{0}', space=sflag, size = 0x4, scoped, tag = 'scoped memory for tpu_custom_call.1']
    #allocation13 [shape = 'u8[32768]{0}', space=vmem, size = 0x8000, scoped, tag = 'output window, operand 0, single buffered']
    #allocation14 [shape = 'u8[4096]{0}', space=vmem, size = 0x1000, scoped, tag = 'output window, operand 1, single buffered']
    #allocation15 [shape = 's32[1]{0}', space=sflag, size = 0x4, scoped, tag = 'scoped memory for tpu_custom_call.1']
    #allocation16 [shape = 'u8[4096]{0}', space=vmem, size = 0x1000, scoped, tag = 'output window, operand 2, single buffered']
    %19 = vsyncpa [#allocation6], 0
    %20 = vsyncpa [#allocation9], 0
    %21 = vsyncpa [#allocation12], 0
    %22 = vsyncpa [#allocation7], 0
    %23 = vsyncpa [#allocation15], 0
    // Predicated region
    $region2: #{tpu_custom_call.1} parent=1 // pred_check
      _
    $region3: #{tpu_custom_call.1} parent=1 // pred_check_branch
      %25 = sbr.rel (0) target = $region5
    $region4: #{tpu_custom_call.1} parent=1 // pred_region
      %s27 = ssub.s32 512, 512
      %28 = vsyncadd [#allocation6], %s27
      %s29 = sshll.u32 [#allocation5], 4
      %s30 = int_to_ptr.vmem [resolvable:$true] %s29
      %35 = dma.hbm_to_vmem [thread:$0]  %s1, 512, %s30, [#allocation6], 128, 128, 8
    $region5: #{tpu_custom_call.1} parent=1 // pred_fallthru
      _
    // Predicated region
    $region6: #{tpu_custom_call.1} parent=1 // pred_check
      _
    $region7: #{tpu_custom_call.1} parent=1 // pred_check_branch
      %37 = sbr.rel (0) target = $region9
    $region8: #{tpu_custom_call.1} parent=1 // pred_region
      %s39 = ssub.s32 512, 512
      %40 = vsyncadd [#allocation9], %s39
      %s41 = sshll.u32 [#allocation8], 4
      %s42 = int_to_ptr.vmem [resolvable:$true] %s41
      %47 = dma.hbm_to_vmem [thread:$0]  %s2, 512, %s42, [#allocation9], 128, 128, 8
    $region9: #{tpu_custom_call.1} parent=1 // pred_fallthru
      _
    // Predicated region
    $region10: #{tpu_custom_call.1} parent=1 // pred_check
      _
    $region11: #{tpu_custom_call.1} parent=1 // pred_check_branch
      %49 = sbr.rel (0) target = $region13
    $region12: #{tpu_custom_call.1} parent=1 // pred_region
      _
    $region13: #{tpu_custom_call.1} parent=1 // pred_fallthru
      _
    // Predicated region
    $region14: #{tpu_custom_call.1} parent=1 // pred_check
      _
    $region15: #{tpu_custom_call.1} parent=1 // pred_check_branch
      %51 = sbr.rel (0) target = $region17
    $region16: #{tpu_custom_call.1} parent=1 // pred_region
      %s53 = ssub.s32 128, 128
      %54 = vsyncadd [#allocation9], %s53
      %s56 = sshll.u32 [#allocation10], 4
      %s57 = int_to_ptr.vmem [resolvable:$true] %s56
      %59 = dma.hbm_to_vmem [thread:$0]  %s4, 128, %s57, [#allocation9]
    $region17: #{tpu_custom_call.1} parent=1 // pred_fallthru
      _
    // Predicated region
    $region18: #{tpu_custom_call.1} parent=1 // pred_check
      _
    $region19: #{tpu_custom_call.1} parent=1 // pred_check_branch
      %61 = sbr.rel (0) target = $region21
    $region20: #{tpu_custom_call.1} parent=1 // pred_region
      %s63 = ssub.s32 512, 512
      %64 = vsyncadd [#allocation12], %s63
      %s65 = sshll.u32 [#allocation11], 4
      %s66 = int_to_ptr.vmem [resolvable:$true] %s65
      %71 = dma.hbm_to_vmem [thread:$0]  %s5, 512, %s66, [#allocation12], 128, 128, 8
    $region21: #{tpu_custom_call.1} parent=1 // pred_fallthru
      _
    // Predicated region
    $region22: #{tpu_custom_call.1} parent=1 // pred_check
      _
    $region23: #{tpu_custom_call.1} parent=1 // pred_check_branch
      %73 = sbr.rel (0) target = $region25
    $region24: #{tpu_custom_call.1} parent=1 // pred_region
      _
    $region25: #{tpu_custom_call.1} parent=1 // pred_fallthru
      _
    // Predicated region
    $region26: #{tpu_custom_call.1} parent=1 // pred_check
      _
    $region27: #{tpu_custom_call.1} parent=1 // pred_check_branch
      %75 = sbr.rel (0) target = $region29
    $region28: #{tpu_custom_call.1} parent=1 // pred_region
      %76 = dma.done [#allocation6], 512
    $region29: #{tpu_custom_call.1} parent=1 // pred_fallthru
      _
    // Predicated region
    $region30: #{tpu_custom_call.1} parent=1 // pred_check
      _
    $region31: #{tpu_custom_call.1} parent=1 // pred_check_branch
      %78 = sbr.rel (0) target = $region33
    $region32: #{tpu_custom_call.1} parent=1 // pred_region
      %79 = dma.done [#allocation9], 512
    $region33: #{tpu_custom_call.1} parent=1 // pred_fallthru
      _
    // Predicated region
    $region34: #{tpu_custom_call.1} parent=1 // pred_check
      _
    $region35: #{tpu_custom_call.1} parent=1 // pred_check_branch
      %81 = sbr.rel (0) target = $region37
    $region36: #{tpu_custom_call.1} parent=1 // pred_region
      %82 = dma.done [#allocation9], 128
    $region37: #{tpu_custom_call.1} parent=1 // pred_fallthru
      _
    // Predicated region
    $region38: #{tpu_custom_call.1} parent=1 // pred_check
      _
    $region39: #{tpu_custom_call.1} parent=1 // pred_check_branch
      %84 = sbr.rel (0) target = $region41
    $region40: #{tpu_custom_call.1} parent=1 // pred_region
      %85 = dma.done [#allocation12], 512
    $region41: #{tpu_custom_call.1} parent=1 // pred_fallthru
      _
    %s86 = smul.u32 0, 8
    %v87 = vld [vmem:[%s3] sm:$0xff]
    %v88 = vld [vmem:[#allocation10] sm:$0xff]
    %s89 = sld [smem:[#allocation4 + %s86]]
    %s90 = scalar_lea.vmem [#allocation5], %s89
    %v91 = vld [vmem:[%s90] sm:$0x1]
    %s92 = sadd.s32 %s86, 1
    %s93 = sld [smem:[#allocation4 + %s92]]
    %s94 = scalar_lea.vmem [#allocation5], %s93
    %v95 = vld [vmem:[%s94] sm:$0x1]
    %s96 = sadd.s32 %s86, 2
    %s97 = sld [smem:[#allocation4 + %s96]]
    %s98 = scalar_lea.vmem [#allocation5], %s97
    %v99 = vld [vmem:[%s98] sm:$0x1]
    %s100 = sadd.s32 %s86, 3
    %s101 = sld [smem:[#allocation4 + %s100]]
    %s102 = scalar_lea.vmem [#allocation5], %s101
    %v103 = vld [vmem:[%s102] sm:$0x1]
    %s104 = sadd.s32 %s86, 4
    %s105 = sld [smem:[#allocation4 + %s104]]
    %s106 = scalar_lea.vmem [#allocation5], %s105
    %v107 = vld [vmem:[%s106] sm:$0x1]
    %s108 = sadd.s32 %s86, 5
    %s109 = sld [smem:[#allocation4 + %s108]]
    %s110 = scalar_lea.vmem [#allocation5], %s109
    %v111 = vld [vmem:[%s110] sm:$0x1]
    %s112 = sadd.s32 %s86, 6
    %s113 = sld [smem:[#allocation4 + %s112]]
    %s114 = scalar_lea.vmem [#allocation5], %s113
    %v115 = vld [vmem:[%s114] sm:$0x1]
    %s116 = sadd.s32 %s86, 7
    %s117 = sld [smem:[#allocation4 + %s116]]
    %s118 = scalar_lea.vmem [#allocation5], %s117
    %v119 = vld [vmem:[%s118] sm:$0x1]
    %v121 = vrot.slane %v95, 7
    %v124 = vrot.slane %v99, 6
    %v127 = vrot.slane %v103, 5
    %v130 = vrot.slane %v107, 4
    %v133 = vrot.slane %v111, 3
    %v136 = vrot.slane %v115, 2
    %v139 = vrot.slane %v119, 1
    %vm141 = vcmask 1040384
    %v142 = vsel %vm141, %v91, %v121
    %vm143 = vcmask 1041408
    %v144 = vsel %vm143, %v142, %v124
    %vm145 = vcmask 1042432
    %v146 = vsel %vm145, %v144, %v127
    %vm147 = vcmask 1043456
    %v148 = vsel %vm147, %v146, %v130
    %vm149 = vcmask 1044480
    %v150 = vsel %vm149, %v148, %v133
    %vm151 = vcmask 1045504
    %v152 = vsel %vm151, %v150, %v136
    %vm153 = vcmask 1046528
    %v154 = vsel %vm153, %v152, %v139
    %v155 = vld [vmem:[#allocation8] sm:$0xff]
    %v156 = vld [vmem:[#allocation8 + $0x8] sm:$0xff]
    %v157 = vld [vmem:[#allocation8 + $0x10] sm:$0xff]
    %v158 = vld [vmem:[#allocation8 + $0x18] sm:$0xff]
    %vm159 = vcmask 261120
    %v161 = vsel %vm159, %v87, 0
    %163 = vmatprep.subr.mxu0 0.0
    %164 = vmatpush1.msra.mxu0 %v155
    %165 = vmatprep.subr.mxu0 0.0
    %166 = vmatpush1.msra.mxu0 %v156
    %167 = vmatprep.subr.mxu0 0.0
    %168 = vmatpush1.msra.mxu0 %v157
    %169 = vmatprep.subr.mxu0 0.0
    %170 = vmatpush1.msra.mxu0 %v158
    %171 = vmatprep.subr.mxu0 0.0
    %172 = vmatpush1.msra.mxu0 0.0
    %173 = vmatprep.subr.mxu0 0.0
    %174 = vmatpush1.msra.mxu0 0.0
    %175 = vmatprep.subr.mxu0 0.0
    %176 = vmatpush1.msra.mxu0 0.0
    %177 = vmatprep.subr.mxu0 0.0
    %178 = vmatpush1.msra.mxu0 0.0
    %179 = vmatprep.subr.mxu0 0.0
    %180 = vmatpush1.msra.mxu0 0.0
    %181 = vmatprep.subr.mxu0 0.0
    %182 = vmatpush1.msra.mxu0 0.0
    %183 = vmatprep.subr.mxu0 0.0
    %184 = vmatpush1.msra.mxu0 0.0
    %185 = vmatprep.subr.mxu0 0.0
    %186 = vmatpush1.msra.mxu0 0.0
    %187 = vmatprep.subr.mxu0 0.0
    %188 = vmatpush1.msra.mxu0 0.0
    %189 = vmatprep.subr.mxu0 0.0
    %190 = vmatpush1.msra.mxu0 0.0
    %191 = vmatprep.subr.mxu0 0.0
    %192 = vmatpush1.msra.mxu0 0.0
    %193 = vmatprep.subr.mxu0 0.0
    %194 = vmatpush1.msra.mxu0 0.0
    %195 = vmatprep.subr.mxu0 0.0
    %196 = vmatpush1.msra.mxu0 0.0
    %197 = vmatprep.subr.mxu0 0.0
    %198 = vmatpush1.msra.mxu0 0.0
    %199 = vmatprep.subr.mxu0 0.0
    %200 = vmatpush1.msra.mxu0 0.0
    %201 = vmatprep.subr.mxu0 0.0
    %202 = vmatpush1.msra.mxu0 0.0
    %203 = vmatprep.subr.mxu0 0.0
    %204 = vmatpush1.msra.mxu0 0.0
    %205 = vmatprep.subr.mxu0 0.0
    %206 = vmatpush1.msra.mxu0 0.0
    %207 = vmatprep.subr.mxu0 0.0
    %208 = vmatpush1.msra.mxu0 0.0
    %209 = vmatprep.subr.mxu0 0.0
    %210 = vmatpush1.msra.mxu0 0.0
    %211 = vmatprep.subr.mxu0 0.0
    %212 = vmatpush1.msra.mxu0 0.0
    %213 = vmatprep.subr.mxu0 0.0
    %214 = vmatpush1.msra.mxu0 0.0
    %215 = vmatprep.subr.mxu0 0.0
    %216 = vmatpush1.msra.mxu0 0.0
    %217 = vmatprep.subr.mxu0 0.0
    %218 = vmatpush1.msra.mxu0 0.0
    %219 = vmatprep.subr.mxu0 0.0
    %220 = vmatpush1.msra.mxu0 0.0
    %221 = vmatprep.subr.mxu0 0.0
    %222 = vmatpush1.msra.mxu0 0.0
    %223 = vmatprep.subr.mxu0 0.0
    %224 = vmatpush1.msra.mxu0 0.0
    %225 = vmatprep.subr.mxu0 0.0
    %226 = vmatpush1.msra.mxu0 0.0
    %227 = vmatprep.mubr.f32.mxu0 0.0
    %228 = vmatmul.mubr.f32.gmra.mrb[0].mxu0 %v161
    %v229 = vpop.f32.mrb[0].mxu0
    %v230 = vadd.f32 0.0, %v229
    %v231 = vpop.f32.mrb[0].mxu0
    %232 = vdwg.mxu0
    %v233 = vadd.f32 %v154, %v230
    %v234 = vxor.u32 %v233, 2147483648
    %v235 = vmul.f32 %v234, 1.442695
    %v236 = vpow.pop %v235
    %v237 = vadd.f32 %v236, 1.0
    %v238 = vrcp.pop %v237
    %v239 = vmul.f32 1.0, %v238
    %v240 = vtanh.pop %v233
    %242 = vrot.lane.b32.xlu0 %v88, 32
    %v243 = vpop.permute.xlu0 %242
    %v245 = vmul.f32 %v239, %v243
    %247 = vrot.lane.b32.xlu0 %v240, 64
    %v248 = vpop.permute.xlu0 %247
    %v250 = vmul.f32 %v239, %v248
    %252 = vrot.lane.b32.xlu0 %v250, 32
    %v253 = vpop.permute.xlu0 %252
    %v255 = vadd.f32 %v245, %v253
    %v256 = vtanh.pop %v255
    %258 = vrot.lane.b32.xlu0 %v256, 64
    %v259 = vpop.permute.xlu0 %258
    %v261 = vmul.f32 %v239, %v259
    %263 = vrot.lane.b32.xlu0 %v261, 32
    %v264 = vpop.permute.xlu0 %263
    %266 = vst.msk [vmem:[#allocation2] sm:$0xff] %vm159, %v264
    %s267 = sadd.s32 %s86, 8
    %s268 = sld [smem:[#allocation4 + %s267]]
    %s269 = scalar_lea.vmem [#allocation5], %s268
    %v270 = vld [vmem:[%s269] sm:$0x1]
    %s271 = sadd.s32 %s86, 9
    %s272 = sld [smem:[#allocation4 + %s271]]
    %s273 = scalar_lea.vmem [#allocation5], %s272
    %v274 = vld [vmem:[%s273] sm:$0x1]
    %s275 = sadd.s32 %s86, 10
    %s276 = sld [smem:[#allocation4 + %s275]]
    %s277 = scalar_lea.vmem [#allocation5], %s276
    %v278 = vld [vmem:[%s277] sm:$0x1]
    %s279 = sadd.s32 %s86, 11
    %s280 = sld [smem:[#allocation4 + %s279]]
    %s281 = scalar_lea.vmem [#allocation5], %s280
    %v282 = vld [vmem:[%s281] sm:$0x1]
    %s283 = sadd.s32 %s86, 12
    %s284 = sld [smem:[#allocation4 + %s283]]
    %s285 = scalar_lea.vmem [#allocation5], %s284
    %v286 = vld [vmem:[%s285] sm:$0x1]
    %s287 = sadd.s32 %s86, 13
    %s288 = sld [smem:[#allocation4 + %s287]]
    %s289 = scalar_lea.vmem [#allocation5], %s288
    %v290 = vld [vmem:[%s289] sm:$0x1]
    %s291 = sadd.s32 %s86, 14
    %s292 = sld [smem:[#allocation4 + %s291]]
    %s293 = scalar_lea.vmem [#allocation5], %s292
    %v294 = vld [vmem:[%s293] sm:$0x1]
    %s295 = sadd.s32 %s86, 15
    %s296 = sld [smem:[#allocation4 + %s295]]
    %s297 = scalar_lea.vmem [#allocation5], %s296
    %v298 = vld [vmem:[%s297] sm:$0x1]
    %v300 = vrot.slane %v274, 7
    %v303 = vrot.slane %v278, 6
    %v306 = vrot.slane %v282, 5
    %v309 = vrot.slane %v286, 4
    %v312 = vrot.slane %v290, 3
    %v315 = vrot.slane %v294, 2
    %v318 = vrot.slane %v298, 1
    %v320 = vsel %vm141, %v270, %v300
    %v321 = vsel %vm143, %v320, %v303
    %v322 = vsel %vm145, %v321, %v306
    %v323 = vsel %vm147, %v322, %v309
    %v324 = vsel %vm149, %v323, %v312
    %v325 = vsel %vm151, %v324, %v315
    %v326 = vsel %vm153, %v325, %v318
    %v327 = vld [vmem:[#allocation8] sm:$0xff]
    %v328 = vld [vmem:[#allocation8 + $0x8] sm:$0xff]
    %v329 = vld [vmem:[#allocation8 + $0x10] sm:$0xff]
    %v330 = vld [vmem:[#allocation8 + $0x18] sm:$0xff]
    %v331 = vsel %vm159, %v264, 0
    %333 = vmatprep.subr.mxu0 0.0
    %334 = vmatpush1.msra.mxu0 %v327
    %335 = vmatprep.subr.mxu0 0.0
    %336 = vmatpush1.msra.mxu0 %v328
    %337 = vmatprep.subr.mxu0 0.0
    %338 = vmatpush1.msra.mxu0 %v329
    %339 = vmatprep.subr.mxu0 0.0
    %340 = vmatpush1.msra.mxu0 %v330
    %341 = vmatprep.subr.mxu0 0.0
    %342 = vmatpush1.msra.mxu0 0.0
    %343 = vmatprep.subr.mxu0 0.0
    %344 = vmatpush1.msra.mxu0 0.0
    %345 = vmatprep.subr.mxu0 0.0
    %346 = vmatpush1.msra.mxu0 0.0
    %347 = vmatprep.subr.mxu0 0.0
    %348 = vmatpush1.msra.mxu0 0.0
    %349 = vmatprep.subr.mxu0 0.0
    %350 = vmatpush1.msra.mxu0 0.0
    %351 = vmatprep.subr.mxu0 0.0
    %352 = vmatpush1.msra.mxu0 0.0
    %353 = vmatprep.subr.mxu0 0.0
    %354 = vmatpush1.msra.mxu0 0.0
    %355 = vmatprep.subr.mxu0 0.0
    %356 = vmatpush1.msra.mxu0 0.0
    %357 = vmatprep.subr.mxu0 0.0
    %358 = vmatpush1.msra.mxu0 0.0
    %359 = vmatprep.subr.mxu0 0.0
    %360 = vmatpush1.msra.mxu0 0.0
    %361 = vmatprep.subr.mxu0 0.0
    %362 = vmatpush1.msra.mxu0 0.0
    %363 = vmatprep.subr.mxu0 0.0
    %364 = vmatpush1.msra.mxu0 0.0
    %365 = vmatprep.subr.mxu0 0.0
    %366 = vmatpush1.msra.mxu0 0.0
    %367 = vmatprep.subr.mxu0 0.0
    %368 = vmatpush1.msra.mxu0 0.0
    %369 = vmatprep.subr.mxu0 0.0
    %370 = vmatpush1.msra.mxu0 0.0
    %371 = vmatprep.subr.mxu0 0.0
    %372 = vmatpush1.msra.mxu0 0.0
    %373 = vmatprep.subr.mxu0 0.0
    %374 = vmatpush1.msra.mxu0 0.0
    %375 = vmatprep.subr.mxu0 0.0
    %376 = vmatpush1.msra.mxu0 0.0
    %377 = vmatprep.subr.mxu0 0.0
    %378 = vmatpush1.msra.mxu0 0.0
    %379 = vmatprep.subr.mxu0 0.0
    %380 = vmatpush1.msra.mxu0 0.0
    %381 = vmatprep.subr.mxu0 0.0
    %382 = vmatpush1.msra.mxu0 0.0
    %383 = vmatprep.subr.mxu0 0.0
    %384 = vmatpush1.msra.mxu0 0.0
    %385 = vmatprep.subr.mxu0 0.0
    %386 = vmatpush1.msra.mxu0 0.0
    %387 = vmatprep.subr.mxu0 0.0
    %388 = vmatpush1.msra.mxu0 0.0
    %389 = vmatprep.subr.mxu0 0.0
    %390 = vmatpush1.msra.mxu0 0.0
    %391 = vmatprep.subr.mxu0 0.0
    %392 = vmatpush1.msra.mxu0 0.0
    %393 = vmatprep.subr.mxu0 0.0
    %394 = vmatpush1.msra.mxu0 0.0
    %395 = vmatprep.subr.mxu0 0.0
    %396 = vmatpush1.msra.mxu0 0.0
    %397 = vmatprep.mubr.f32.mxu0 0.0
    %398 = vmatmul.mubr.f32.gmra.mrb[0].mxu0 %v331
    %v399 = vpop.f32.mrb[0].mxu0
    %v400 = vadd.f32 0.0, %v399
    %v401 = vpop.f32.mrb[0].mxu0
    %402 = vdwg.mxu0
    %v403 = vadd.f32 %v326, %v400
    %v404 = vxor.u32 %v403, 2147483648
    %v405 = vmul.f32 %v404, 1.442695
    %v406 = vpow.pop %v405
    %v407 = vadd.f32 %v406, 1.0
    %v408 = vrcp.pop %v407
    %v409 = vmul.f32 1.0, %v408
    %v410 = vtanh.pop %v403
    %v411 = vmul.f32 %v409, %v255
    %413 = vrot.lane.b32.xlu0 %v410, 64
    %v414 = vpop.permute.xlu0 %413
    %v416 = vmul.f32 %v409, %v414
    %418 = vrot.lane.b32.xlu0 %v416, 32
    %v419 = vpop.permute.xlu0 %418
    %v421 = vadd.f32 %v411, %v419
    %v422 = vtanh.pop %v421
    %424 = vrot.lane.b32.xlu0 %v422, 64
    %v425 = vpop.permute.xlu0 %424
    %v427 = vmul.f32 %v409, %v425
    %429 = vrot.lane.b32.xlu0 %v427, 32
    %v430 = vpop.permute.xlu0 %429
    %s432 = scalar_lea.vmem [#allocation2], 8
    %433 = vst.msk [vmem:[%s432] sm:$0xff] %vm159, %v430
    %s434 = sadd.s32 %s86, 16
    %s435 = sld [smem:[#allocation4 + %s434]]
    %s436 = scalar_lea.vmem [#allocation5], %s435
    %v437 = vld [vmem:[%s436] sm:$0x1]
    %s438 = sadd.s32 %s86, 17
    %s439 = sld [smem:[#allocation4 + %s438]]
    %s440 = scalar_lea.vmem [#allocation5], %s439
    %v441 = vld [vmem:[%s440] sm:$0x1]
    %s442 = sadd.s32 %s86, 18
    %s443 = sld [smem:[#allocation4 + %s442]]
    %s444 = scalar_lea.vmem [#allocation5], %s443
    %v445 = vld [vmem:[%s444] sm:$0x1]
    %s446 = sadd.s32 %s86, 19
    %s447 = sld [smem:[#allocation4 + %s446]]
    %s448 = scalar_lea.vmem [#allocation5], %s447
    %v449 = vld [vmem:[%s448] sm:$0x1]
    %s450 = sadd.s32 %s86, 20
    %s451 = sld [smem:[#allocation4 + %s450]]
    %s452 = scalar_lea.vmem [#allocation5], %s451
    %v453 = vld [vmem:[%s452] sm:$0x1]
    %s454 = sadd.s32 %s86, 21
    %s455 = sld [smem:[#allocation4 + %s454]]
    %s456 = scalar_lea.vmem [#allocation5], %s455
    %v457 = vld [vmem:[%s456] sm:$0x1]
    %s458 = sadd.s32 %s86, 22
    %s459 = sld [smem:[#allocation4 + %s458]]
    %s460 = scalar_lea.vmem [#allocation5], %s459
    %v461 = vld [vmem:[%s460] sm:$0x1]
    %s462 = sadd.s32 %s86, 23
    %s463 = sld [smem:[#allocation4 + %s462]]
    %s464 = scalar_lea.vmem [#allocation5], %s463
    %v465 = vld [vmem:[%s464] sm:$0x1]
    %v467 = vrot.slane %v441, 7
    %v470 = vrot.slane %v445, 6
    %v473 = vrot.slane %v449, 5
    %v476 = vrot.slane %v453, 4
    %v479 = vrot.slane %v457, 3
    %v482 = vrot.slane %v461, 2
    %v485 = vrot.slane %v465, 1
    %v487 = vsel %vm141, %v437, %v467
    %v488 = vsel %vm143, %v487, %v470
    %v489 = vsel %vm145, %v488, %v473
    %v490 = vsel %vm147, %v489, %v476
    %v491 = vsel %vm149, %v490, %v479
    %v492 = vsel %vm151, %v491, %v482
    %v493 = vsel %vm153, %v492, %v485
    %v494 = vld [vmem:[#allocation8] sm:$0xff]
    %v495 = vld [vmem:[#allocation8 + $0x8] sm:$0xff]
    %v496 = vld [vmem:[#allocation8 + $0x10] sm:$0xff]
    %v497 = vld [vmem:[#allocation8 + $0x18] sm:$0xff]
    %v498 = vsel %vm159, %v430, 0
    %500 = vmatprep.subr.mxu0 0.0
    %501 = vmatpush1.msra.mxu0 %v494
    %502 = vmatprep.subr.mxu0 0.0
    %503 = vmatpush1.msra.mxu0 %v495
    %504 = vmatprep.subr.mxu0 0.0
    %505 = vmatpush1.msra.mxu0 %v496
    %506 = vmatprep.subr.mxu0 0.0
    %507 = vmatpush1.msra.mxu0 %v497
    %508 = vmatprep.subr.mxu0 0.0
    %509 = vmatpush1.msra.mxu0 0.0
    %510 = vmatprep.subr.mxu0 0.0
    %511 = vmatpush1.msra.mxu0 0.0
    %512 = vmatprep.subr.mxu0 0.0
    %513 = vmatpush1.msra.mxu0 0.0
    %514 = vmatprep.subr.mxu0 0.0
    %515 = vmatpush1.msra.mxu0 0.0
    %516 = vmatprep.subr.mxu0 0.0
    %517 = vmatpush1.msra.mxu0 0.0
    %518 = vmatprep.subr.mxu0 0.0
    %519 = vmatpush1.msra.mxu0 0.0
    %520 = vmatprep.subr.mxu0 0.0
    %521 = vmatpush1.msra.mxu0 0.0
    %522 = vmatprep.subr.mxu0 0.0
    %523 = vmatpush1.msra.mxu0 0.0
    %524 = vmatprep.subr.mxu0 0.0
    %525 = vmatpush1.msra.mxu0 0.0
    %526 = vmatprep.subr.mxu0 0.0
    %527 = vmatpush1.msra.mxu0 0.0
    %528 = vmatprep.subr.mxu0 0.0
    %529 = vmatpush1.msra.mxu0 0.0
    %530 = vmatprep.subr.mxu0 0.0
    %531 = vmatpush1.msra.mxu0 0.0
    %532 = vmatprep.subr.mxu0 0.0
    %533 = vmatpush1.msra.mxu0 0.0
    %534 = vmatprep.subr.mxu0 0.0
    %535 = vmatpush1.msra.mxu0 0.0
    %536 = vmatprep.subr.mxu0 0.0
    %537 = vmatpush1.msra.mxu0 0.0
    %538 = vmatprep.subr.mxu0 0.0
    %539 = vmatpush1.msra.mxu0 0.0
    %540 = vmatprep.subr.mxu0 0.0
    %541 = vmatpush1.msra.mxu0 0.0
    %542 = vmatprep.subr.mxu0 0.0
    %543 = vmatpush1.msra.mxu0 0.0
    %544 = vmatprep.subr.mxu0 0.0
    %545 = vmatpush1.msra.mxu0 0.0
    %546 = vmatprep.subr.mxu0 0.0
    %547 = vmatpush1.msra.mxu0 0.0
    %548 = vmatprep.subr.mxu0 0.0
    %549 = vmatpush1.msra.mxu0 0.0
    %550 = vmatprep.subr.mxu0 0.0
    %551 = vmatpush1.msra.mxu0 0.0
    %552 = vmatprep.subr.mxu0 0.0
    %553 = vmatpush1.msra.mxu0 0.0
    %554 = vmatprep.subr.mxu0 0.0
    %555 = vmatpush1.msra.mxu0 0.0
    %556 = vmatprep.subr.mxu0 0.0
    %557 = vmatpush1.msra.mxu0 0.0
    %558 = vmatprep.subr.mxu0 0.0
    %559 = vmatpush1.msra.mxu0 0.0
    %560 = vmatprep.subr.mxu0 0.0
    %561 = vmatpush1.msra.mxu0 0.0
    %562 = vmatprep.subr.mxu0 0.0
    %563 = vmatpush1.msra.mxu0 0.0
    %564 = vmatprep.mubr.f32.mxu0 0.0
    %565 = vmatmul.mubr.f32.gmra.mrb[0].mxu0 %v498
    %v566 = vpop.f32.mrb[0].mxu0
    %v567 = vadd.f32 0.0, %v566
    %v568 = vpop.f32.mrb[0].mxu0
    %569 = vdwg.mxu0
    %v570 = vadd.f32 %v493, %v567
    %v571 = vxor.u32 %v570, 2147483648
    %v572 = vmul.f32 %v571, 1.442695
    %v573 = vpow.pop %v572
    %v574 = vadd.f32 %v573, 1.0
    %v575 = vrcp.pop %v574
    %v576 = vmul.f32 1.0, %v575
    %v577 = vtanh.pop %v570
    %v578 = vmul.f32 %v576, %v421
    %580 = vrot.lane.b32.xlu0 %v577, 64
    %v581 = vpop.permute.xlu0 %580
    %v583 = vmul.f32 %v576, %v581
    %585 = vrot.lane.b32.xlu0 %v583, 32
    %v586 = vpop.permute.xlu0 %585
    %v588 = vadd.f32 %v578, %v586
    %v589 = vtanh.pop %v588
    %591 = vrot.lane.b32.xlu0 %v589, 64
    %v592 = vpop.permute.xlu0 %591
    %v594 = vmul.f32 %v576, %v592
    %596 = vrot.lane.b32.xlu0 %v594, 32
    %v597 = vpop.permute.xlu0 %596
    %s599 = scalar_lea.vmem [#allocation2], 16
    %600 = vst.msk [vmem:[%s599] sm:$0xff] %vm159, %v597
    %s601 = sadd.s32 %s86, 24
    %s602 = sld [smem:[#allocation4 + %s601]]
    %s603 = scalar_lea.vmem [#allocation5], %s602
    %v604 = vld [vmem:[%s603] sm:$0x1]
    %s605 = sadd.s32 %s86, 25
    %s606 = sld [smem:[#allocation4 + %s605]]
    %s607 = scalar_lea.vmem [#allocation5], %s606
    %v608 = vld [vmem:[%s607] sm:$0x1]
    %s609 = sadd.s32 %s86, 26
    %s610 = sld [smem:[#allocation4 + %s609]]
    %s611 = scalar_lea.vmem [#allocation5], %s610
    %v612 = vld [vmem:[%s611] sm:$0x1]
    %s613 = sadd.s32 %s86, 27
    %s614 = sld [smem:[#allocation4 + %s613]]
    %s615 = scalar_lea.vmem [#allocation5], %s614
    %v616 = vld [vmem:[%s615] sm:$0x1]
    %s617 = sadd.s32 %s86, 28
    %s618 = sld [smem:[#allocation4 + %s617]]
    %s619 = scalar_lea.vmem [#allocation5], %s618
    %v620 = vld [vmem:[%s619] sm:$0x1]
    %s621 = sadd.s32 %s86, 29
    %s622 = sld [smem:[#allocation4 + %s621]]
    %s623 = scalar_lea.vmem [#allocation5], %s622
    %v624 = vld [vmem:[%s623] sm:$0x1]
    %s625 = sadd.s32 %s86, 30
    %s626 = sld [smem:[#allocation4 + %s625]]
    %s627 = scalar_lea.vmem [#allocation5], %s626
    %v628 = vld [vmem:[%s627] sm:$0x1]
    %s629 = sadd.s32 %s86, 31
    %s630 = sld [smem:[#allocation4 + %s629]]
    %s631 = scalar_lea.vmem [#allocation5], %s630
    %v632 = vld [vmem:[%s631] sm:$0x1]
    %v634 = vrot.slane %v608, 7
    %v637 = vrot.slane %v612, 6
    %v640 = vrot.slane %v616, 5
    %v643 = vrot.slane %v620, 4
    %v646 = vrot.slane %v624, 3
    %v649 = vrot.slane %v628, 2
    %v652 = vrot.slane %v632, 1
    %v654 = vsel %vm141, %v604, %v634
    %v655 = vsel %vm143, %v654, %v637
    %v656 = vsel %vm145, %v655, %v640
    %v657 = vsel %vm147, %v656, %v643
    %v658 = vsel %vm149, %v657, %v646
    %v659 = vsel %vm151, %v658, %v649
    %v660 = vsel %vm153, %v659, %v652
    %v661 = vld [vmem:[#allocation8] sm:$0xff]
    %v662 = vld [vmem:[#allocation8 + $0x8] sm:$0xff]
    %v663 = vld [vmem:[#allocation8 + $0x10] sm:$0xff]
    %v664 = vld [vmem:[#allocation8 + $0x18] sm:$0xff]
    %v665 = vsel %vm159, %v597, 0
    %667 = vmatprep.subr.mxu0 0.0
    %668 = vmatpush1.msra.mxu0 %v661
    %669 = vmatprep.subr.mxu0 0.0
    %670 = vmatpush1.msra.mxu0 %v662
    %671 = vmatprep.subr.mxu0 0.0
    %672 = vmatpush1.msra.mxu0 %v663
    %673 = vmatprep.subr.mxu0 0.0
    %674 = vmatpush1.msra.mxu0 %v664
    %675 = vmatprep.subr.mxu0 0.0
    %676 = vmatpush1.msra.mxu0 0.0
    %677 = vmatprep.subr.mxu0 0.0
    %678 = vmatpush1.msra.mxu0 0.0
    %679 = vmatprep.subr.mxu0 0.0
    %680 = vmatpush1.msra.mxu0 0.0
    %681 = vmatprep.subr.mxu0 0.0
    %682 = vmatpush1.msra.mxu0 0.0
    %683 = vmatprep.subr.mxu0 0.0
    %684 = vmatpush1.msra.mxu0 0.0
    %685 = vmatprep.subr.mxu0 0.0
    %686 = vmatpush1.msra.mxu0 0.0
    %687 = vmatprep.subr.mxu0 0.0
    %688 = vmatpush1.msra.mxu0 0.0
    %689 = vmatprep.subr.mxu0 0.0
    %690 = vmatpush1.msra.mxu0 0.0
    %691 = vmatprep.subr.mxu0 0.0
    %692 = vmatpush1.msra.mxu0 0.0
    %693 = vmatprep.subr.mxu0 0.0
    %694 = vmatpush1.msra.mxu0 0.0
    %695 = vmatprep.subr.mxu0 0.0
    %696 = vmatpush1.msra.mxu0 0.0
    %697 = vmatprep.subr.mxu0 0.0
    %698 = vmatpush1.msra.mxu0 0.0
    %699 = vmatprep.subr.mxu0 0.0
    %700 = vmatpush1.msra.mxu0 0.0
    %701 = vmatprep.subr.mxu0 0.0
    %702 = vmatpush1.msra.mxu0 0.0
    %703 = vmatprep.subr.mxu0 0.0
    %704 = vmatpush1.msra.mxu0 0.0
    %705 = vmatprep.subr.mxu0 0.0
    %706 = vmatpush1.msra.mxu0 0.0
    %707 = vmatprep.subr.mxu0 0.0
    %708 = vmatpush1.msra.mxu0 0.0
    %709 = vmatprep.subr.mxu0 0.0
    %710 = vmatpush1.msra.mxu0 0.0
    %711 = vmatprep.subr.mxu0 0.0
    %712 = vmatpush1.msra.mxu0 0.0
    %713 = vmatprep.subr.mxu0 0.0
    %714 = vmatpush1.msra.mxu0 0.0
    %715 = vmatprep.subr.mxu0 0.0
    %716 = vmatpush1.msra.mxu0 0.0
    %717 = vmatprep.subr.mxu0 0.0
    %718 = vmatpush1.msra.mxu0 0.0
    %719 = vmatprep.subr.mxu0 0.0
    %720 = vmatpush1.msra.mxu0 0.0
    %721 = vmatprep.subr.mxu0 0.0
    %722 = vmatpush1.msra.mxu0 0.0
    %723 = vmatprep.subr.mxu0 0.0
    %724 = vmatpush1.msra.mxu0 0.0
    %725 = vmatprep.subr.mxu0 0.0
    %726 = vmatpush1.msra.mxu0 0.0
    %727 = vmatprep.subr.mxu0 0.0
    %728 = vmatpush1.msra.mxu0 0.0
    %729 = vmatprep.subr.mxu0 0.0
    %730 = vmatpush1.msra.mxu0 0.0
    %731 = vmatprep.mubr.f32.mxu0 0.0
    %732 = vmatmul.mubr.f32.gmra.mrb[0].mxu0 %v665
    %v733 = vpop.f32.mrb[0].mxu0
    %v734 = vadd.f32 0.0, %v733
    %v735 = vpop.f32.mrb[0].mxu0
    %736 = vdwg.mxu0
    %v737 = vadd.f32 %v660, %v734
    %v738 = vxor.u32 %v737, 2147483648
    %v739 = vmul.f32 %v738, 1.442695
    %v740 = vpow.pop %v739
    %v741 = vadd.f32 %v740, 1.0
    %v742 = vrcp.pop %v741
    %v743 = vmul.f32 1.0, %v742
    %v744 = vtanh.pop %v737
    %v745 = vmul.f32 %v743, %v588
    %747 = vrot.lane.b32.xlu0 %v744, 64
    %v748 = vpop.permute.xlu0 %747
    %v750 = vmul.f32 %v743, %v748
    %752 = vrot.lane.b32.xlu0 %v750, 32
    %v753 = vpop.permute.xlu0 %752
    %v755 = vadd.f32 %v745, %v753
    %v756 = vtanh.pop %v755
    %758 = vrot.lane.b32.xlu0 %v756, 64
    %v759 = vpop.permute.xlu0 %758
    %v761 = vmul.f32 %v743, %v759
    %763 = vrot.lane.b32.xlu0 %v761, 32
    %v764 = vpop.permute.xlu0 %763
    %s766 = scalar_lea.vmem [#allocation2], 24
    %767 = vst.msk [vmem:[%s766] sm:$0xff] %vm159, %v764
    %s768 = sadd.s32 %s86, 32
    %s769 = sld [smem:[#allocation4 + %s768]]
    %s770 = scalar_lea.vmem [#allocation5], %s769
    %v771 = vld [vmem:[%s770] sm:$0x1]
    %s772 = sadd.s32 %s86, 33
    %s773 = sld [smem:[#allocation4 + %s772]]
    %s774 = scalar_lea.vmem [#allocation5], %s773
    %v775 = vld [vmem:[%s774] sm:$0x1]
    %s776 = sadd.s32 %s86, 34
    %s777 = sld [smem:[#allocation4 + %s776]]
    %s778 = scalar_lea.vmem [#allocation5], %s777
    %v779 = vld [vmem:[%s778] sm:$0x1]
    %s780 = sadd.s32 %s86, 35
    %s781 = sld [smem:[#allocation4 + %s780]]
    %s782 = scalar_lea.vmem [#allocation5], %s781
    %v783 = vld [vmem:[%s782] sm:$0x1]
    %s784 = sadd.s32 %s86, 36
    %s785 = sld [smem:[#allocation4 + %s784]]
    %s786 = scalar_lea.vmem [#allocation5], %s785
    %v787 = vld [vmem:[%s786] sm:$0x1]
    %s788 = sadd.s32 %s86, 37
    %s789 = sld [smem:[#allocation4 + %s788]]
    %s790 = scalar_lea.vmem [#allocation5], %s789
    %v791 = vld [vmem:[%s790] sm:$0x1]
    %s792 = sadd.s32 %s86, 38
    %s793 = sld [smem:[#allocation4 + %s792]]
    %s794 = scalar_lea.vmem [#allocation5], %s793
    %v795 = vld [vmem:[%s794] sm:$0x1]
    %s796 = sadd.s32 %s86, 39
    %s797 = sld [smem:[#allocation4 + %s796]]
    %s798 = scalar_lea.vmem [#allocation5], %s797
    %v799 = vld [vmem:[%s798] sm:$0x1]
    %v801 = vrot.slane %v775, 7
    %v804 = vrot.slane %v779, 6
    %v807 = vrot.slane %v783, 5
    %v810 = vrot.slane %v787, 4
    %v813 = vrot.slane %v791, 3
    %v816 = vrot.slane %v795, 2
    %v819 = vrot.slane %v799, 1
    %v821 = vsel %vm141, %v771, %v801
    %v822 = vsel %vm143, %v821, %v804
    %v823 = vsel %vm145, %v822, %v807
    %v824 = vsel %vm147, %v823, %v810
    %v825 = vsel %vm149, %v824, %v813
    %v826 = vsel %vm151, %v825, %v816
    %v827 = vsel %vm153, %v826, %v819
    %v828 = vld [vmem:[#allocation8] sm:$0xff]
    %v829 = vld [vmem:[#allocation8 + $0x8] sm:$0xff]
    %v830 = vld [vmem:[#allocation8 + $0x10] sm:$0xff]
    %v831 = vld [vmem:[#allocation8 + $0x18] sm:$0xff]
    %v832 = vsel %vm159, %v764, 0
    %834 = vmatprep.subr.mxu0 0.0
    %835 = vmatpush1.msra.mxu0 %v828
    %836 = vmatprep.subr.mxu0 0.0
    %837 = vmatpush1.msra.mxu0 %v829
    %838 = vmatprep.subr.mxu0 0.0
    %839 = vmatpush1.msra.mxu0 %v830
    %840 = vmatprep.subr.mxu0 0.0
    %841 = vmatpush1.msra.mxu0 %v831
    %842 = vmatprep.subr.mxu0 0.0
    %843 = vmatpush1.msra.mxu0 0.0
    %844 = vmatprep.subr.mxu0 0.0
    %845 = vmatpush1.msra.mxu0 0.0
    %846 = vmatprep.subr.mxu0 0.0
    %847 = vmatpush1.msra.mxu0 0.0
    %848 = vmatprep.subr.mxu0 0.0
    %849 = vmatpush1.msra.mxu0 0.0
    %850 = vmatprep.subr.mxu0 0.0
    %851 = vmatpush1.msra.mxu0 0.0
    %852 = vmatprep.subr.mxu0 0.0
    %853 = vmatpush1.msra.mxu0 0.0
    %854 = vmatprep.subr.mxu0 0.0
    %855 = vmatpush1.msra.mxu0 0.0
    %856 = vmatprep.subr.mxu0 0.0
    %857 = vmatpush1.msra.mxu0 0.0
    %858 = vmatprep.subr.mxu0 0.0
    %859 = vmatpush1.msra.mxu0 0.0
    %860 = vmatprep.subr.mxu0 0.0
    %861 = vmatpush1.msra.mxu0 0.0
    %862 = vmatprep.subr.mxu0 0.0
    %863 = vmatpush1.msra.mxu0 0.0
    %864 = vmatprep.subr.mxu0 0.0
    %865 = vmatpush1.msra.mxu0 0.0
    %866 = vmatprep.subr.mxu0 0.0
    %867 = vmatpush1.msra.mxu0 0.0
    %868 = vmatprep.subr.mxu0 0.0
    %869 = vmatpush1.msra.mxu0 0.0
    %870 = vmatprep.subr.mxu0 0.0
    %871 = vmatpush1.msra.mxu0 0.0
    %872 = vmatprep.subr.mxu0 0.0
    %873 = vmatpush1.msra.mxu0 0.0
    %874 = vmatprep.subr.mxu0 0.0
    %875 = vmatpush1.msra.mxu0 0.0
    %876 = vmatprep.subr.mxu0 0.0
    %877 = vmatpush1.msra.mxu0 0.0
    %878 = vmatprep.subr.mxu0 0.0
    %879 = vmatpush1.msra.mxu0 0.0
    %880 = vmatprep.subr.mxu0 0.0
    %881 = vmatpush1.msra.mxu0 0.0
    %882 = vmatprep.subr.mxu0 0.0
    %883 = vmatpush1.msra.mxu0 0.0
    %884 = vmatprep.subr.mxu0 0.0
    %885 = vmatpush1.msra.mxu0 0.0
    %886 = vmatprep.subr.mxu0 0.0
    %887 = vmatpush1.msra.mxu0 0.0
    %888 = vmatprep.subr.mxu0 0.0
    %889 = vmatpush1.msra.mxu0 0.0
    %890 = vmatprep.subr.mxu0 0.0
    %891 = vmatpush1.msra.mxu0 0.0
    %892 = vmatprep.subr.mxu0 0.0
    %893 = vmatpush1.msra.mxu0 0.0
    %894 = vmatprep.subr.mxu0 0.0
    %895 = vmatpush1.msra.mxu0 0.0
    %896 = vmatprep.subr.mxu0 0.0
    %897 = vmatpush1.msra.mxu0 0.0
    %898 = vmatprep.mubr.f32.mxu0 0.0
    %899 = vmatmul.mubr.f32.gmra.mrb[0].mxu0 %v832
    %v900 = vpop.f32.mrb[0].mxu0
    %v901 = vadd.f32 0.0, %v900
    %v902 = vpop.f32.mrb[0].mxu0
    %903 = vdwg.mxu0
    %v904 = vadd.f32 %v827, %v901
    %v905 = vxor.u32 %v904, 2147483648
    %v906 = vmul.f32 %v905, 1.442695
    %v907 = vpow.pop %v906
    %v908 = vadd.f32 %v907, 1.0
    %v909 = vrcp.pop %v908
    %v910 = vmul.f32 1.0, %v909
    %v911 = vtanh.pop %v904
    %v912 = vmul.f32 %v910, %v755
    %914 = vrot.lane.b32.xlu0 %v911, 64
    %v915 = vpop.permute.xlu0 %914
    %v917 = vmul.f32 %v910, %v915
    %919 = vrot.lane.b32.xlu0 %v917, 32
    %v920 = vpop.permute.xlu0 %919
    %v922 = vadd.f32 %v912, %v920
    %v923 = vtanh.pop %v922
    %925 = vrot.lane.b32.xlu0 %v923, 64
    %v926 = vpop.permute.xlu0 %925
    %v928 = vmul.f32 %v910, %v926
    %930 = vrot.lane.b32.xlu0 %v928, 32
    %v931 = vpop.permute.xlu0 %930
    %s933 = scalar_lea.vmem [#allocation2], 32
    %934 = vst.msk [vmem:[%s933] sm:$0xff] %vm159, %v931
    %s935 = sadd.s32 %s86, 40
    %s936 = sld [smem:[#allocation4 + %s935]]
    %s937 = scalar_lea.vmem [#allocation5], %s936
    %v938 = vld [vmem:[%s937] sm:$0x1]
    %s939 = sadd.s32 %s86, 41
    %s940 = sld [smem:[#allocation4 + %s939]]
    %s941 = scalar_lea.vmem [#allocation5], %s940
    %v942 = vld [vmem:[%s941] sm:$0x1]
    %s943 = sadd.s32 %s86, 42
    %s944 = sld [smem:[#allocation4 + %s943]]
    %s945 = scalar_lea.vmem [#allocation5], %s944
    %v946 = vld [vmem:[%s945] sm:$0x1]
    %s947 = sadd.s32 %s86, 43
    %s948 = sld [smem:[#allocation4 + %s947]]
    %s949 = scalar_lea.vmem [#allocation5], %s948
    %v950 = vld [vmem:[%s949] sm:$0x1]
    %s951 = sadd.s32 %s86, 44
    %s952 = sld [smem:[#allocation4 + %s951]]
    %s953 = scalar_lea.vmem [#allocation5], %s952
    %v954 = vld [vmem:[%s953] sm:$0x1]
    %s955 = sadd.s32 %s86, 45
    %s956 = sld [smem:[#allocation4 + %s955]]
    %s957 = scalar_lea.vmem [#allocation5], %s956
    %v958 = vld [vmem:[%s957] sm:$0x1]
    %s959 = sadd.s32 %s86, 46
    %s960 = sld [smem:[#allocation4 + %s959]]
    %s961 = scalar_lea.vmem [#allocation5], %s960
    %v962 = vld [vmem:[%s961] sm:$0x1]
    %s963 = sadd.s32 %s86, 47
    %s964 = sld [smem:[#allocation4 + %s963]]
    %s965 = scalar_lea.vmem [#allocation5], %s964
    %v966 = vld [vmem:[%s965] sm:$0x1]
    %v968 = vrot.slane %v942, 7
    %v971 = vrot.slane %v946, 6
    %v974 = vrot.slane %v950, 5
    %v977 = vrot.slane %v954, 4
    %v980 = vrot.slane %v958, 3
    %v983 = vrot.slane %v962, 2
    %v986 = vrot.slane %v966, 1
    %v988 = vsel %vm141, %v938, %v968
    %v989 = vsel %vm143, %v988, %v971
    %v990 = vsel %vm145, %v989, %v974
    %v991 = vsel %vm147, %v990, %v977
    %v992 = vsel %vm149, %v991, %v980
    %v993 = vsel %vm151, %v992, %v983
    %v994 = vsel %vm153, %v993, %v986
    %v995 = vld [vmem:[#allocation8] sm:$0xff]
    %v996 = vld [vmem:[#allocation8 + $0x8] sm:$0xff]
    %v997 = vld [vmem:[#allocation8 + $0x10] sm:$0xff]
    %v998 = vld [vmem:[#allocation8 + $0x18] sm:$0xff]
    %v999 = vsel %vm159, %v931, 0
    %1001 = vmatprep.subr.mxu0 0.0
    %1002 = vmatpush1.msra.mxu0 %v995
    %1003 = vmatprep.subr.mxu0 0.0
    %1004 = vmatpush1.msra.mxu0 %v996
    %1005 = vmatprep.subr.mxu0 0.0
    %1006 = vmatpush1.msra.mxu0 %v997
    %1007 = vmatprep.subr.mxu0 0.0
    %1008 = vmatpush1.msra.mxu0 %v998
    %1009 = vmatprep.subr.mxu0 0.0
    %1010 = vmatpush1.msra.mxu0 0.0
    %1011 = vmatprep.subr.mxu0 0.0
    %1012 = vmatpush1.msra.mxu0 0.0
    %1013 = vmatprep.subr.mxu0 0.0
    %1014 = vmatpush1.msra.mxu0 0.0
    %1015 = vmatprep.subr.mxu0 0.0
    %1016 = vmatpush1.msra.mxu0 0.0
    %1017 = vmatprep.subr.mxu0 0.0
    %1018 = vmatpush1.msra.mxu0 0.0
    %1019 = vmatprep.subr.mxu0 0.0
    %1020 = vmatpush1.msra.mxu0 0.0
    %1021 = vmatprep.subr.mxu0 0.0
    %1022 = vmatpush1.msra.mxu0 0.0
    %1023 = vmatprep.subr.mxu0 0.0
    %1024 = vmatpush1.msra.mxu0 0.0
    %1025 = vmatprep.subr.mxu0 0.0
    %1026 = vmatpush1.msra.mxu0 0.0
    %1027 = vmatprep.subr.mxu0 0.0
    %1028 = vmatpush1.msra.mxu0 0.0
    %1029 = vmatprep.subr.mxu0 0.0
    %1030 = vmatpush1.msra.mxu0 0.0
    %1031 = vmatprep.subr.mxu0 0.0
    %1032 = vmatpush1.msra.mxu0 0.0
    %1033 = vmatprep.subr.mxu0 0.0
    %1034 = vmatpush1.msra.mxu0 0.0
    %1035 = vmatprep.subr.mxu0 0.0
    %1036 = vmatpush1.msra.mxu0 0.0
    %1037 = vmatprep.subr.mxu0 0.0
    %1038 = vmatpush1.msra.mxu0 0.0
    %1039 = vmatprep.subr.mxu0 0.0
    %1040 = vmatpush1.msra.mxu0 0.0
    %1041 = vmatprep.subr.mxu0 0.0
    %1042 = vmatpush1.msra.mxu0 0.0
    %1043 = vmatprep.subr.mxu0 0.0
    %1044 = vmatpush1.msra.mxu0 0.0
    %1045 = vmatprep.subr.mxu0 0.0
    %1046 = vmatpush1.msra.mxu0 0.0
    %1047 = vmatprep.subr.mxu0 0.0
    %1048 = vmatpush1.msra.mxu0 0.0
    %1049 = vmatprep.subr.mxu0 0.0
    %1050 = vmatpush1.msra.mxu0 0.0
    %1051 = vmatprep.subr.mxu0 0.0
    %1052 = vmatpush1.msra.mxu0 0.0
    %1053 = vmatprep.subr.mxu0 0.0
    %1054 = vmatpush1.msra.mxu0 0.0
    %1055 = vmatprep.subr.mxu0 0.0
    %1056 = vmatpush1.msra.mxu0 0.0
    %1057 = vmatprep.subr.mxu0 0.0
    %1058 = vmatpush1.msra.mxu0 0.0
    %1059 = vmatprep.subr.mxu0 0.0
    %1060 = vmatpush1.msra.mxu0 0.0
    %1061 = vmatprep.subr.mxu0 0.0
    %1062 = vmatpush1.msra.mxu0 0.0
    %1063 = vmatprep.subr.mxu0 0.0
    %1064 = vmatpush1.msra.mxu0 0.0
    %1065 = vmatprep.mubr.f32.mxu0 0.0
    %1066 = vmatmul.mubr.f32.gmra.mrb[0].mxu0 %v999
    %v1067 = vpop.f32.mrb[0].mxu0
    %v1068 = vadd.f32 0.0, %v1067
    %v1069 = vpop.f32.mrb[0].mxu0
    %1070 = vdwg.mxu0
    %v1071 = vadd.f32 %v994, %v1068
    %v1072 = vxor.u32 %v1071, 2147483648
    %v1073 = vmul.f32 %v1072, 1.442695
    %v1074 = vpow.pop %v1073
    %v1075 = vadd.f32 %v1074, 1.0
    %v1076 = vrcp.pop %v1075
    %v1077 = vmul.f32 1.0, %v1076
    %v1078 = vtanh.pop %v1071
    %v1079 = vmul.f32 %v1077, %v922
    %1081 = vrot.lane.b32.xlu0 %v1078, 64
    %v1082 = vpop.permute.xlu0 %1081
    %v1084 = vmul.f32 %v1077, %v1082
    %1086 = vrot.lane.b32.xlu0 %v1084, 32
    %v1087 = vpop.permute.xlu0 %1086
    %v1089 = vadd.f32 %v1079, %v1087
    %v1090 = vtanh.pop %v1089
    %1092 = vrot.lane.b32.xlu0 %v1090, 64
    %v1093 = vpop.permute.xlu0 %1092
    %v1095 = vmul.f32 %v1077, %v1093
    %1097 = vrot.lane.b32.xlu0 %v1095, 32
    %v1098 = vpop.permute.xlu0 %1097
    %s1100 = scalar_lea.vmem [#allocation2], 40
    %1101 = vst.msk [vmem:[%s1100] sm:$0xff] %vm159, %v1098
    %s1102 = sadd.s32 %s86, 48
    %s1103 = sld [smem:[#allocation4 + %s1102]]
    %s1104 = scalar_lea.vmem [#allocation5], %s1103
    %v1105 = vld [vmem:[%s1104] sm:$0x1]
    %s1106 = sadd.s32 %s86, 49
    %s1107 = sld [smem:[#allocation4 + %s1106]]
    %s1108 = scalar_lea.vmem [#allocation5], %s1107
    %v1109 = vld [vmem:[%s1108] sm:$0x1]
    %s1110 = sadd.s32 %s86, 50
    %s1111 = sld [smem:[#allocation4 + %s1110]]
    %s1112 = scalar_lea.vmem [#allocation5], %s1111
    %v1113 = vld [vmem:[%s1112] sm:$0x1]
    %s1114 = sadd.s32 %s86, 51
    %s1115 = sld [smem:[#allocation4 + %s1114]]
    %s1116 = scalar_lea.vmem [#allocation5], %s1115
    %v1117 = vld [vmem:[%s1116] sm:$0x1]
    %s1118 = sadd.s32 %s86, 52
    %s1119 = sld [smem:[#allocation4 + %s1118]]
    %s1120 = scalar_lea.vmem [#allocation5], %s1119
    %v1121 = vld [vmem:[%s1120] sm:$0x1]
    %s1122 = sadd.s32 %s86, 53
    %s1123 = sld [smem:[#allocation4 + %s1122]]
    %s1124 = scalar_lea.vmem [#allocation5], %s1123
    %v1125 = vld [vmem:[%s1124] sm:$0x1]
    %s1126 = sadd.s32 %s86, 54
    %s1127 = sld [smem:[#allocation4 + %s1126]]
    %s1128 = scalar_lea.vmem [#allocation5], %s1127
    %v1129 = vld [vmem:[%s1128] sm:$0x1]
    %s1130 = sadd.s32 %s86, 55
    %s1131 = sld [smem:[#allocation4 + %s1130]]
    %s1132 = scalar_lea.vmem [#allocation5], %s1131
    %v1133 = vld [vmem:[%s1132] sm:$0x1]
    %v1135 = vrot.slane %v1109, 7
    %v1138 = vrot.slane %v1113, 6
    %v1141 = vrot.slane %v1117, 5
    %v1144 = vrot.slane %v1121, 4
    %v1147 = vrot.slane %v1125, 3
    %v1150 = vrot.slane %v1129, 2
    %v1153 = vrot.slane %v1133, 1
    %v1155 = vsel %vm141, %v1105, %v1135
    %v1156 = vsel %vm143, %v1155, %v1138
    %v1157 = vsel %vm145, %v1156, %v1141
    %v1158 = vsel %vm147, %v1157, %v1144
    %v1159 = vsel %vm149, %v1158, %v1147
    %v1160 = vsel %vm151, %v1159, %v1150
    %v1161 = vsel %vm153, %v1160, %v1153
    %v1162 = vld [vmem:[#allocation8] sm:$0xff]
    %v1163 = vld [vmem:[#allocation8 + $0x8] sm:$0xff]
    %v1164 = vld [vmem:[#allocation8 + $0x10] sm:$0xff]
    %v1165 = vld [vmem:[#allocation8 + $0x18] sm:$0xff]
    %v1166 = vsel %vm159, %v1098, 0
    %1168 = vmatprep.subr.mxu0 0.0
    %1169 = vmatpush1.msra.mxu0 %v1162
    %1170 = vmatprep.subr.mxu0 0.0
    %1171 = vmatpush1.msra.mxu0 %v1163
    %1172 = vmatprep.subr.mxu0 0.0
    %1173 = vmatpush1.msra.mxu0 %v1164
    %1174 = vmatprep.subr.mxu0 0.0
    %1175 = vmatpush1.msra.mxu0 %v1165
    %1176 = vmatprep.subr.mxu0 0.0
    %1177 = vmatpush1.msra.mxu0 0.0
    %1178 = vmatprep.subr.mxu0 0.0
    %1179 = vmatpush1.msra.mxu0 0.0
    %1180 = vmatprep.subr.mxu0 0.0
    %1181 = vmatpush1.msra.mxu0 0.0
    %1182 = vmatprep.subr.mxu0 0.0
    %1183 = vmatpush1.msra.mxu0 0.0
    %1184 = vmatprep.subr.mxu0 0.0
    %1185 = vmatpush1.msra.mxu0 0.0
    %1186 = vmatprep.subr.mxu0 0.0
    %1187 = vmatpush1.msra.mxu0 0.0
    %1188 = vmatprep.subr.mxu0 0.0
    %1189 = vmatpush1.msra.mxu0 0.0
    %1190 = vmatprep.subr.mxu0 0.0
    %1191 = vmatpush1.msra.mxu0 0.0
    %1192 = vmatprep.subr.mxu0 0.0
    %1193 = vmatpush1.msra.mxu0 0.0
    %1194 = vmatprep.subr.mxu0 0.0
    %1195 = vmatpush1.msra.mxu0 0.0
    %1196 = vmatprep.subr.mxu0 0.0
    %1197 = vmatpush1.msra.mxu0 0.0
    %1198 = vmatprep.subr.mxu0 0.0
    %1199 = vmatpush1.msra.mxu0 0.0
    %1200 = vmatprep.subr.mxu0 0.0
    %1201 = vmatpush1.msra.mxu0 0.0
    %1202 = vmatprep.subr.mxu0 0.0
    %1203 = vmatpush1.msra.mxu0 0.0
    %1204 = vmatprep.subr.mxu0 0.0
    %1205 = vmatpush1.msra.mxu0 0.0
    %1206 = vmatprep.subr.mxu0 0.0
    %1207 = vmatpush1.msra.mxu0 0.0
    %1208 = vmatprep.subr.mxu0 0.0
    %1209 = vmatpush1.msra.mxu0 0.0
    %1210 = vmatprep.subr.mxu0 0.0
    %1211 = vmatpush1.msra.mxu0 0.0
    %1212 = vmatprep.subr.mxu0 0.0
    %1213 = vmatpush1.msra.mxu0 0.0
    %1214 = vmatprep.subr.mxu0 0.0
    %1215 = vmatpush1.msra.mxu0 0.0
    %1216 = vmatprep.subr.mxu0 0.0
    %1217 = vmatpush1.msra.mxu0 0.0
    %1218 = vmatprep.subr.mxu0 0.0
    %1219 = vmatpush1.msra.mxu0 0.0
    %1220 = vmatprep.subr.mxu0 0.0
    %1221 = vmatpush1.msra.mxu0 0.0
    %1222 = vmatprep.subr.mxu0 0.0
    %1223 = vmatpush1.msra.mxu0 0.0
    %1224 = vmatprep.subr.mxu0 0.0
    %1225 = vmatpush1.msra.mxu0 0.0
    %1226 = vmatprep.subr.mxu0 0.0
    %1227 = vmatpush1.msra.mxu0 0.0
    %1228 = vmatprep.subr.mxu0 0.0
    %1229 = vmatpush1.msra.mxu0 0.0
    %1230 = vmatprep.subr.mxu0 0.0
    %1231 = vmatpush1.msra.mxu0 0.0
    %1232 = vmatprep.mubr.f32.mxu0 0.0
    %1233 = vmatmul.mubr.f32.gmra.mrb[0].mxu0 %v1166
    %v1234 = vpop.f32.mrb[0].mxu0
    %v1235 = vadd.f32 0.0, %v1234
    %v1236 = vpop.f32.mrb[0].mxu0
    %1237 = vdwg.mxu0
    %v1238 = vadd.f32 %v1161, %v1235
    %v1239 = vxor.u32 %v1238, 2147483648
    %v1240 = vmul.f32 %v1239, 1.442695
    %v1241 = vpow.pop %v1240
    %v1242 = vadd.f32 %v1241, 1.0
    %v1243 = vrcp.pop %v1242
    %v1244 = vmul.f32 1.0, %v1243
    %v1245 = vtanh.pop %v1238
    %v1246 = vmul.f32 %v1244, %v1089
    %1248 = vrot.lane.b32.xlu0 %v1245, 64
    %v1249 = vpop.permute.xlu0 %1248
    %v1251 = vmul.f32 %v1244, %v1249
    %1253 = vrot.lane.b32.xlu0 %v1251, 32
    %v1254 = vpop.permute.xlu0 %1253
    %v1256 = vadd.f32 %v1246, %v1254
    %v1257 = vtanh.pop %v1256
    %1259 = vrot.lane.b32.xlu0 %v1257, 64
    %v1260 = vpop.permute.xlu0 %1259
    %v1262 = vmul.f32 %v1244, %v1260
    %1264 = vrot.lane.b32.xlu0 %v1262, 32
    %v1265 = vpop.permute.xlu0 %1264
    %s1267 = scalar_lea.vmem [#allocation2], 48
    %1268 = vst.msk [vmem:[%s1267] sm:$0xff] %vm159, %v1265
    %s1269 = sadd.s32 %s86, 56
    %s1270 = sld [smem:[#allocation4 + %s1269]]
    %s1271 = scalar_lea.vmem [#allocation5], %s1270
    %v1272 = vld [vmem:[%s1271] sm:$0x1]
    %s1273 = sadd.s32 %s86, 57
    %s1274 = sld [smem:[#allocation4 + %s1273]]
    %s1275 = scalar_lea.vmem [#allocation5], %s1274
    %v1276 = vld [vmem:[%s1275] sm:$0x1]
    %s1277 = sadd.s32 %s86, 58
    %s1278 = sld [smem:[#allocation4 + %s1277]]
    %s1279 = scalar_lea.vmem [#allocation5], %s1278
    %v1280 = vld [vmem:[%s1279] sm:$0x1]
    %s1281 = sadd.s32 %s86, 59
    %s1282 = sld [smem:[#allocation4 + %s1281]]
    %s1283 = scalar_lea.vmem [#allocation5], %s1282
    %v1284 = vld [vmem:[%s1283] sm:$0x1]
    %s1285 = sadd.s32 %s86, 60
    %s1286 = sld [smem:[#allocation4 + %s1285]]
    %s1287 = scalar_lea.vmem [#allocation5], %s1286
    %v1288 = vld [vmem:[%s1287] sm:$0x1]
    %s1289 = sadd.s32 %s86, 61
    %s1290 = sld [smem:[#allocation4 + %s1289]]
    %s1291 = scalar_lea.vmem [#allocation5], %s1290
    %v1292 = vld [vmem:[%s1291] sm:$0x1]
    %s1293 = sadd.s32 %s86, 62
    %s1294 = sld [smem:[#allocation4 + %s1293]]
    %s1295 = scalar_lea.vmem [#allocation5], %s1294
    %v1296 = vld [vmem:[%s1295] sm:$0x1]
    %s1297 = sadd.s32 %s86, 63
    %s1298 = sld [smem:[#allocation4 + %s1297]]
    %s1299 = scalar_lea.vmem [#allocation5], %s1298
    %v1300 = vld [vmem:[%s1299] sm:$0x1]
    %v1302 = vrot.slane %v1276, 7
    %v1305 = vrot.slane %v1280, 6
    %v1308 = vrot.slane %v1284, 5
    %v1311 = vrot.slane %v1288, 4
    %v1314 = vrot.slane %v1292, 3
    %v1317 = vrot.slane %v1296, 2
    %v1320 = vrot.slane %v1300, 1
    %v1322 = vsel %vm141, %v1272, %v1302
    %v1323 = vsel %vm143, %v1322, %v1305
    %v1324 = vsel %vm145, %v1323, %v1308
    %v1325 = vsel %vm147, %v1324, %v1311
    %v1326 = vsel %vm149, %v1325, %v1314
    %v1327 = vsel %vm151, %v1326, %v1317
    %v1328 = vsel %vm153, %v1327, %v1320
    %v1329 = vld [vmem:[#allocation8] sm:$0xff]
    %v1330 = vld [vmem:[#allocation8 + $0x8] sm:$0xff]
    %v1331 = vld [vmem:[#allocation8 + $0x10] sm:$0xff]
    %v1332 = vld [vmem:[#allocation8 + $0x18] sm:$0xff]
    %v1333 = vsel %vm159, %v1265, 0
    %1335 = vmatprep.subr.mxu0 0.0
    %1336 = vmatpush1.msra.mxu0 %v1329
    %1337 = vmatprep.subr.mxu0 0.0
    %1338 = vmatpush1.msra.mxu0 %v1330
    %1339 = vmatprep.subr.mxu0 0.0
    %1340 = vmatpush1.msra.mxu0 %v1331
    %1341 = vmatprep.subr.mxu0 0.0
    %1342 = vmatpush1.msra.mxu0 %v1332
    %1343 = vmatprep.subr.mxu0 0.0
    %1344 = vmatpush1.msra.mxu0 0.0
    %1345 = vmatprep.subr.mxu0 0.0
    %1346 = vmatpush1.msra.mxu0 0.0
    %1347 = vmatprep.subr.mxu0 0.0
    %1348 = vmatpush1.msra.mxu0 0.0
    %1349 = vmatprep.subr.mxu0 0.0
    %1350 = vmatpush1.msra.mxu0 0.0
    %1351 = vmatprep.subr.mxu0 0.0
    %1352 = vmatpush1.msra.mxu0 0.0
    %1353 = vmatprep.subr.mxu0 0.0
    %1354 = vmatpush1.msra.mxu0 0.0
    %1355 = vmatprep.subr.mxu0 0.0
    %1356 = vmatpush1.msra.mxu0 0.0
    %1357 = vmatprep.subr.mxu0 0.0
    %1358 = vmatpush1.msra.mxu0 0.0
    %1359 = vmatprep.subr.mxu0 0.0
    %1360 = vmatpush1.msra.mxu0 0.0
    %1361 = vmatprep.subr.mxu0 0.0
    %1362 = vmatpush1.msra.mxu0 0.0
    %1363 = vmatprep.subr.mxu0 0.0
    %1364 = vmatpush1.msra.mxu0 0.0
    %1365 = vmatprep.subr.mxu0 0.0
    %1366 = vmatpush1.msra.mxu0 0.0
    %1367 = vmatprep.subr.mxu0 0.0
    %1368 = vmatpush1.msra.mxu0 0.0
    %1369 = vmatprep.subr.mxu0 0.0
    %1370 = vmatpush1.msra.mxu0 0.0
    %1371 = vmatprep.subr.mxu0 0.0
    %1372 = vmatpush1.msra.mxu0 0.0
    %1373 = vmatprep.subr.mxu0 0.0
    %1374 = vmatpush1.msra.mxu0 0.0
    %1375 = vmatprep.subr.mxu0 0.0
    %1376 = vmatpush1.msra.mxu0 0.0
    %1377 = vmatprep.subr.mxu0 0.0
    %1378 = vmatpush1.msra.mxu0 0.0
    %1379 = vmatprep.subr.mxu0 0.0
    %1380 = vmatpush1.msra.mxu0 0.0
    %1381 = vmatprep.subr.mxu0 0.0
    %1382 = vmatpush1.msra.mxu0 0.0
    %1383 = vmatprep.subr.mxu0 0.0
    %1384 = vmatpush1.msra.mxu0 0.0
    %1385 = vmatprep.subr.mxu0 0.0
    %1386 = vmatpush1.msra.mxu0 0.0
    %1387 = vmatprep.subr.mxu0 0.0
    %1388 = vmatpush1.msra.mxu0 0.0
    %1389 = vmatprep.subr.mxu0 0.0
    %1390 = vmatpush1.msra.mxu0 0.0
    %1391 = vmatprep.subr.mxu0 0.0
    %1392 = vmatpush1.msra.mxu0 0.0
    %1393 = vmatprep.subr.mxu0 0.0
    %1394 = vmatpush1.msra.mxu0 0.0
    %1395 = vmatprep.subr.mxu0 0.0
    %1396 = vmatpush1.msra.mxu0 0.0
    %1397 = vmatprep.subr.mxu0 0.0
    %1398 = vmatpush1.msra.mxu0 0.0
    %1399 = vmatprep.mubr.f32.mxu0 0.0
    %1400 = vmatmul.mubr.f32.gmra.mrb[0].mxu0 %v1333
    %v1401 = vpop.f32.mrb[0].mxu0
    %v1402 = vadd.f32 0.0, %v1401
    %v1403 = vpop.f32.mrb[0].mxu0
    %1404 = vdwg.mxu0
    %v1405 = vadd.f32 %v1328, %v1402
    %v1406 = vxor.u32 %v1405, 2147483648
    %v1407 = vmul.f32 %v1406, 1.442695
    %v1408 = vpow.pop %v1407
    %v1409 = vadd.f32 %v1408, 1.0
    %v1410 = vrcp.pop %v1409
    %v1411 = vmul.f32 1.0, %v1410
    %v1412 = vtanh.pop %v1405
    %v1413 = vmul.f32 %v1411, %v1256
    %1415 = vrot.lane.b32.xlu0 %v1412, 64
    %v1416 = vpop.permute.xlu0 %1415
    %v1418 = vmul.f32 %v1411, %v1416
    %1420 = vrot.lane.b32.xlu0 %v1418, 32
    %v1421 = vpop.permute.xlu0 %1420
    %v1423 = vadd.f32 %v1413, %v1421
    %v1424 = vtanh.pop %v1423
    %1426 = vrot.lane.b32.xlu0 %v1424, 64
    %v1427 = vpop.permute.xlu0 %1426
    %v1429 = vmul.f32 %v1411, %v1427
    %1431 = vrot.lane.b32.xlu0 %v1429, 32
    %v1432 = vpop.permute.xlu0 %1431
    %s1434 = scalar_lea.vmem [#allocation2], 56
    %1435 = vst.msk [vmem:[%s1434] sm:$0xff] %vm159, %v1432
    %1436 = vst.msk [vmem:[#allocation14] sm:$0xff] %vm159, %v1432
    %1438 = vrot.lane.b32.xlu0 %v1423, 96
    %v1439 = vpop.permute.xlu0 %1438
    %1441 = vst.msk [vmem:[#allocation16] sm:$0xff] %vm159, %v1439
    %v1442 = vld [vmem:[#allocation2] sm:$0xff]
    %v1443 = vld [vmem:[#allocation2 + $0x8] sm:$0xff]
    %v1444 = vld [vmem:[#allocation2 + $0x10] sm:$0xff]
    %v1445 = vld [vmem:[#allocation2 + $0x18] sm:$0xff]
    %v1446 = vld [vmem:[#allocation2 + $0x20] sm:$0xff]
    %v1447 = vld [vmem:[#allocation2 + $0x28] sm:$0xff]
    %v1448 = vld [vmem:[#allocation2 + $0x30] sm:$0xff]
    %v1449 = vld [vmem:[#allocation2 + $0x38] sm:$0xff]
    %v1450 = vld [vmem:[#allocation11] sm:$0xff]
    %v1451 = vld [vmem:[#allocation11 + $0x8] sm:$0xff]
    %v1452 = vld [vmem:[#allocation11 + $0x10] sm:$0xff]
    %v1453 = vld [vmem:[#allocation11 + $0x18] sm:$0xff]
    %v1454 = vld [vmem:[%s6] sm:$0x1]
    %v1456 = vlaneseq
    %v1457 = vshrl.u32 %v1456, 7
    %v1458 = vsub.s32 0, %v1457
    %v1459 = vrot.slane %v1454, %v1458
    %v1462 = vsel %vm159, %v1442, 0
    %v1465 = vsel %vm159, %v1443, 0
    %v1468 = vsel %vm159, %v1444, 0
    %v1471 = vsel %vm159, %v1445, 0
    %v1474 = vsel %vm159, %v1446, 0
    %v1477 = vsel %vm159, %v1447, 0
    %v1480 = vsel %vm159, %v1448, 0
    %v1483 = vsel %vm159, %v1449, 0
    %1485 = vmatprep.subr.mxu0 0.0
    %1486 = vmatpush1.msra.mxu0 %v1450
    %1487 = vmatprep.subr.mxu0 0.0
    %1488 = vmatpush1.msra.mxu0 %v1451
    %1489 = vmatprep.subr.mxu0 0.0
    %1490 = vmatpush1.msra.mxu0 %v1452
    %1491 = vmatprep.subr.mxu0 0.0
    %1492 = vmatpush1.msra.mxu0 %v1453
    %1493 = vmatprep.subr.mxu0 0.0
    %1494 = vmatpush1.msra.mxu0 0.0
    %1495 = vmatprep.subr.mxu0 0.0
    %1496 = vmatpush1.msra.mxu0 0.0
    %1497 = vmatprep.subr.mxu0 0.0
    %1498 = vmatpush1.msra.mxu0 0.0
    %1499 = vmatprep.subr.mxu0 0.0
    %1500 = vmatpush1.msra.mxu0 0.0
    %1501 = vmatprep.subr.mxu0 0.0
    %1502 = vmatpush1.msra.mxu0 0.0
    %1503 = vmatprep.subr.mxu0 0.0
    %1504 = vmatpush1.msra.mxu0 0.0
    %1505 = vmatprep.subr.mxu0 0.0
    %1506 = vmatpush1.msra.mxu0 0.0
    %1507 = vmatprep.subr.mxu0 0.0
    %1508 = vmatpush1.msra.mxu0 0.0
    %1509 = vmatprep.subr.mxu0 0.0
    %1510 = vmatpush1.msra.mxu0 0.0
    %1511 = vmatprep.subr.mxu0 0.0
    %1512 = vmatpush1.msra.mxu0 0.0
    %1513 = vmatprep.subr.mxu0 0.0
    %1514 = vmatpush1.msra.mxu0 0.0
    %1515 = vmatprep.subr.mxu0 0.0
    %1516 = vmatpush1.msra.mxu0 0.0
    %1517 = vmatprep.subr.mxu0 0.0
    %1518 = vmatpush1.msra.mxu0 0.0
    %1519 = vmatprep.subr.mxu0 0.0
    %1520 = vmatpush1.msra.mxu0 0.0
    %1521 = vmatprep.subr.mxu0 0.0
    %1522 = vmatpush1.msra.mxu0 0.0
    %1523 = vmatprep.subr.mxu0 0.0
    %1524 = vmatpush1.msra.mxu0 0.0
    %1525 = vmatprep.subr.mxu0 0.0
    %1526 = vmatpush1.msra.mxu0 0.0
    %1527 = vmatprep.subr.mxu0 0.0
    %1528 = vmatpush1.msra.mxu0 0.0
    %1529 = vmatprep.subr.mxu0 0.0
    %1530 = vmatpush1.msra.mxu0 0.0
    %1531 = vmatprep.subr.mxu0 0.0
    %1532 = vmatpush1.msra.mxu0 0.0
    %1533 = vmatprep.subr.mxu0 0.0
    %1534 = vmatpush1.msra.mxu0 0.0
    %1535 = vmatprep.subr.mxu0 0.0
    %1536 = vmatpush1.msra.mxu0 0.0
    %1537 = vmatprep.subr.mxu0 0.0
    %1538 = vmatpush1.msra.mxu0 0.0
    %1539 = vmatprep.subr.mxu0 0.0
    %1540 = vmatpush1.msra.mxu0 0.0
    %1541 = vmatprep.subr.mxu0 0.0
    %1542 = vmatpush1.msra.mxu0 0.0
    %1543 = vmatprep.subr.mxu0 0.0
    %1544 = vmatpush1.msra.mxu0 0.0
    %1545 = vmatprep.subr.mxu0 0.0
    %1546 = vmatpush1.msra.mxu0 0.0
    %1547 = vmatprep.subr.mxu0 0.0
    %1548 = vmatpush1.msra.mxu0 0.0
    %1549 = vmatprep.mubr.f32.mxu0 0.0
    %1550 = vmatmul.mubr.f32.gmra.mrb[0].mxu0 %v1462
    %v1551 = vpop.f32.mrb[0].mxu0
    %v1552 = vadd.f32 %v1459, %v1551
    %v1553 = vpop.f32.mrb[0].mxu0
    %1554 = vmatprep.mubr.f32.mxu0 0.0
    %1555 = vmatmul.mubr.f32.gmra.mrb[0].mxu0 %v1465
    %v1556 = vpop.f32.mrb[0].mxu0
    %v1557 = vadd.f32 %v1459, %v1556
    %v1558 = vpop.f32.mrb[0].mxu0
    %1559 = vmatprep.mubr.f32.mxu0 0.0
    %1560 = vmatmul.mubr.f32.gmra.mrb[0].mxu0 %v1468
    %v1561 = vpop.f32.mrb[0].mxu0
    %v1562 = vadd.f32 %v1459, %v1561
    %v1563 = vpop.f32.mrb[0].mxu0
    %1564 = vmatprep.mubr.f32.mxu0 0.0
    %1565 = vmatmul.mubr.f32.gmra.mrb[0].mxu0 %v1471
    %v1566 = vpop.f32.mrb[0].mxu0
    %v1567 = vadd.f32 %v1459, %v1566
    %v1568 = vpop.f32.mrb[0].mxu0
    %1569 = vmatprep.mubr.f32.mxu0 0.0
    %1570 = vmatmul.mubr.f32.gmra.mrb[0].mxu0 %v1474
    %v1571 = vpop.f32.mrb[0].mxu0
    %v1572 = vadd.f32 %v1459, %v1571
    %v1573 = vpop.f32.mrb[0].mxu0
    %1574 = vmatprep.mubr.f32.mxu0 0.0
    %1575 = vmatmul.mubr.f32.gmra.mrb[0].mxu0 %v1477
    %v1576 = vpop.f32.mrb[0].mxu0
    %v1577 = vadd.f32 %v1459, %v1576
    %v1578 = vpop.f32.mrb[0].mxu0
    %1579 = vmatprep.mubr.f32.mxu0 0.0
    %1580 = vmatmul.mubr.f32.gmra.mrb[0].mxu0 %v1480
    %v1581 = vpop.f32.mrb[0].mxu0
    %v1582 = vadd.f32 %v1459, %v1581
    %v1583 = vpop.f32.mrb[0].mxu0
    %1584 = vmatprep.mubr.f32.mxu0 0.0
    %1585 = vmatmul.mubr.f32.gmra.mrb[0].mxu0 %v1483
    %v1586 = vpop.f32.mrb[0].mxu0
    %v1587 = vadd.f32 %v1459, %v1586
    %v1588 = vpop.f32.mrb[0].mxu0
    %1589 = vdwg.mxu0
    %1590 = vst [vmem:[#allocation13] sm:$0xff] %v1552
    %1591 = vst [vmem:[#allocation13 + $0x8] sm:$0xff] %v1557
    %1592 = vst [vmem:[#allocation13 + $0x10] sm:$0xff] %v1562
    %1593 = vst [vmem:[#allocation13 + $0x18] sm:$0xff] %v1567
    %1594 = vst [vmem:[#allocation13 + $0x20] sm:$0xff] %v1572
    %1595 = vst [vmem:[#allocation13 + $0x28] sm:$0xff] %v1577
    %1596 = vst [vmem:[#allocation13 + $0x30] sm:$0xff] %v1582
    %1597 = vst [vmem:[#allocation13 + $0x38] sm:$0xff] %v1587
    // Predicated region
    $region42: #{tpu_custom_call.1} parent=1 // pred_check
      _
    $region43: #{tpu_custom_call.1} parent=1 // pred_check_branch
      %1599 = sbr.rel (0) target = $region45
    $region44: #{tpu_custom_call.1} parent=1 // pred_region
      %s1601 = ssub.s32 1024, 1024
      %1602 = vsyncadd [#allocation7], %s1601
      %s1603 = sshll.u32 [#allocation13], 4
      %s1604 = int_to_ptr.vmem [resolvable:$true] %s1603
      %1609 = dma.vmem_to_hbm [thread:$0]  %s1604, 1024, %s7, [#allocation7], 128, 128, 8
    $region45: #{tpu_custom_call.1} parent=1 // pred_fallthru
      _
    // Predicated region
    $region46: #{tpu_custom_call.1} parent=1 // pred_check
      _
    $region47: #{tpu_custom_call.1} parent=1 // pred_check_branch
      %1611 = sbr.rel (0) target = $region49
    $region48: #{tpu_custom_call.1} parent=1 // pred_region
      %s1613 = ssub.s32 128, 128
      %1614 = vsyncadd [#allocation15], %s1613
      %s1616 = sshll.u32 [#allocation14], 4
      %s1617 = int_to_ptr.vmem [resolvable:$true] %s1616
      %1619 = dma.vmem_to_hbm [thread:$0]  %s1617, 128, %s8, [#allocation15]
    $region49: #{tpu_custom_call.1} parent=1 // pred_fallthru
      _
    // Predicated region
    $region50: #{tpu_custom_call.1} parent=1 // pred_check
      _
    $region51: #{tpu_custom_call.1} parent=1 // pred_check_branch
      %1621 = sbr.rel (0) target = $region53
    $region52: #{tpu_custom_call.1} parent=1 // pred_region
      %s1623 = ssub.s32 128, 128
      %1624 = vsyncadd [#allocation15], %s1623
      %s1626 = sshll.u32 [#allocation16], 4
      %s1627 = int_to_ptr.vmem [resolvable:$true] %s1626
      %1629 = dma.vmem_to_hbm [thread:$0]  %s1627, 128, %s9, [#allocation15]
    $region53: #{tpu_custom_call.1} parent=1 // pred_fallthru
      _
    // Predicated region
    $region54: #{tpu_custom_call.1} parent=1 // pred_check
      _
    $region55: #{tpu_custom_call.1} parent=1 // pred_check_branch
      %1631 = sbr.rel (0) target = $region57
    $region56: #{tpu_custom_call.1} parent=1 // pred_region
      %1632 = dma.done [#allocation7], 1024
    $region57: #{tpu_custom_call.1} parent=1 // pred_fallthru
      _
    // Predicated region
    $region58: #{tpu_custom_call.1} parent=1 // pred_check
      _
    $region59: #{tpu_custom_call.1} parent=1 // pred_check_branch
      %1634 = sbr.rel (0) target = $region61
    $region60: #{tpu_custom_call.1} parent=1 // pred_region
      %1635 = dma.done [#allocation15], 128
    $region61: #{tpu_custom_call.1} parent=1 // pred_fallthru
      _
    // Predicated region
    $region62: #{tpu_custom_call.1} parent=1 // pred_check
      _
    $region63: #{tpu_custom_call.1} parent=1 // pred_check_branch
      %1637 = sbr.rel (0) target = $region65
    $region64: #{tpu_custom_call.1} parent=1 // pred_region
      %1638 = dma.done [#allocation15], 128
    $region65: #{tpu_custom_call.1} parent=1 // pred_fallthru
      _
    %1639 = vsyncpa [#allocation6], 1
    %1640 = vsyncpa [#allocation9], 1
    %1641 = vsyncpa [#allocation12], 1
    %1642 = vsyncpa [#allocation7], 1
    %1643 = vsyncpa [#allocation15], 1

</llo_original>
